<compile_context>
chip_gen: v7x
topology: tpu7x:2x2x1
jax: 0.10.0
libtpu: 0.0.40
codegen_flags: <defaults>
</compile_context>

<pallas_src>
import functools

import jax
import jax.numpy as jnp
from jax import lax
from jax.experimental import pallas as pl
from jax.experimental.pallas import tpu as pltpu

NEG_SLOPE = 0.01   # nn.LeakyReLU default
OUT_PAD = 128      # lane-dense output slab width (>= 1 + num_classes)


def _leaky_relu(x):
    return jnp.where(x > 0, x, NEG_SLOPE * x)


def multitask_heads_kernel(x_ref, pool_ref, w1_ref, b1_ref, w2_ref, b2_ref, out_ref):
    # x_ref:    (B*HW, C)     bf16  spatial-major rows of the NCHW feature map
    # pool_ref: (B, B*HW)     f32   per-batch averaging matrix (1/HW entries)
    # w1_ref:   (C, 2H)       bf16  [wd1 | wc1]
    # b1_ref:   (1, 2H)       f32   [bd1 | bc1]
    # w2_ref:   (2H, 128)     bf16  block-diagonal [wd2 ; wc2], zero padded
    # b2_ref:   (1, 128)      f32   [bd2 | bc2 | 0]
    # out_ref:  (B, 128)      f32   col 0 = sigmoid(disc), cols 1..116 = classifier

    # One fused first-layer matmul for both heads; M = B*HW fills MXU rows.
    h_all = jnp.dot(x_ref[...], w1_ref[...],
                    preferred_element_type=jnp.float32)                 # (B*HW, 2H)

    # AdaptiveAvgPool2d(1) commutes with the (linear) first layer, so apply it
    # after the matmul as a tiny pooling matmul — no partial-lane XLU reduce.
    pooled = jnp.dot(pool_ref[...], h_all,
                     preferred_element_type=jnp.float32)                # (B, 2H)

    h = _leaky_relu(pooled + b1_ref[...])                               # f32 epilogue

    # Fused block-diagonal second layer -> single lane-dense (B, 128) slab.
    z = jnp.dot(h.astype(jnp.bfloat16), w2_ref[...],
                preferred_element_type=jnp.float32) + b2_ref[...]       # (B, 128)

    # Sigmoid only on the discriminator column (column 0).
    col = lax.broadcasted_iota(jnp.int32, z.shape, 1)
    out_ref[...] = jnp.where(col == 0, jax.nn.sigmoid(z), z)


def fuse_head_params(params):
    """Fold the two heads into one (C, 2H) first layer and one block-diagonal,
    lane-dense (2H, 128) second layer.  MXU operands are cast to bf16; biases
    stay f32 (they are added in the f32 epilogue)."""
    wd1, bd1, wd2, bd2, wc1, bc1, wc2, bc2 = params
    C, H = wd1.shape
    NC = wc2.shape[1]
    assert 1 + NC <= OUT_PAD

    w1 = jnp.concatenate([wd1, wc1], axis=1).astype(jnp.bfloat16)       # (C, 2H)
    b1 = jnp.concatenate([bd1, bc1], axis=1).astype(jnp.float32)        # (1, 2H)

    w2 = jnp.zeros((2 * H, OUT_PAD), jnp.float32)
    w2 = w2.at[:H, 0:1].set(wd2).at[H:, 1:1 + NC].set(wc2)
    w2 = w2.astype(jnp.bfloat16)                                        # (2H, 128)

    b2 = jnp.zeros((1, OUT_PAD), jnp.float32)
    b2 = b2.at[:, 0:1].set(bd2).at[:, 1:1 + NC].set(bc2)                # (1, 128)
    return w1, b1, w2, b2


@functools.partial(jax.jit, static_argnames=("num_classes",))
def multitask_heads(dist_feat_nchw, fused_params, *, num_classes):
    """dist_feat_nchw: (B, C, H, W) f32 — last feature level of the backbone."""
    B, C, Hs, Ws = dist_feat_nchw.shape
    HW = Hs * Ws
    w1, b1, w2, b2 = fused_params

    # (B, C, H, W) -> (B*HW, C): spatial-major rows so the pooling matmul sums
    # contiguous per-batch row groups; cast to bf16 for the MXU.
    x = dist_feat_nchw.reshape(B, C, HW).transpose(0, 2, 1).reshape(B * HW, C)
    x = x.astype(jnp.bfloat16)

    # (B, B*HW) averaging matrix: row b has 1/HW over its own HW rows.
    pool = jnp.repeat(jnp.eye(B, dtype=jnp.float32), HW, axis=1) * (1.0 / HW)

    vmem = pl.BlockSpec(memory_space=pltpu.MemorySpace.VMEM)

    # TODO(synk): at real batch sizes, add a grid over B with
    # dimension_semantics=("parallel",) (to engage v7x's second TensorCore) and
    # a B-tile BlockSpec for x/pool sized against v7x's 64 MiB VMEM; at B=2 a
    # grid-less single invocation is strictly cheaper.
    out = pl.pallas_call(
        multitask_heads_kernel,
        out_shape=jax.ShapeDtypeStruct((B, OUT_PAD), jnp.float32),
        in_specs=[vmem] * 6,
        out_specs=vmem,
    )(x, pool, w1, b1, w2, b2)

    disc = out[:, 0]                   # Discriminator(...).view(-1), sigmoid applied in-kernel
    cls = out[:, 1:1 + num_classes]    # Classifier(...)
    return disc, cls


def init_params(key, input_dim, hidden_dim=512, num_classes=116):
    """Deterministic synthetic parameters.  Weights stored as (in, out) so the
    kernel computes x @ W (transpose of the PyTorch nn.Linear layout)."""
    ks = jax.random.split(key, 8)
    s = 0.05
    wd1 = s * jax.random.normal(ks[0], (input_dim, hidden_dim), jnp.float32)
    bd1 = s * jax.random.normal(ks[1], (1, hidden_dim), jnp.float32)
    wd2 = s * jax.random.normal(ks[2], (hidden_dim, 1), jnp.float32)
    bd2 = s * jax.random.normal(ks[3], (1, 1), jnp.float32)
    wc1 = s * jax.random.normal(ks[4], (input_dim, hidden_dim), jnp.float32)
    bc1 = s * jax.random.normal(ks[5], (1, hidden_dim), jnp.float32)
    wc2 = s * jax.random.normal(ks[6], (hidden_dim, num_classes), jnp.float32)
    bc2 = s * jax.random.normal(ks[7], (1, num_classes), jnp.float32)
    return (wd1, bd1, wd2, bd2, wc1, bc1, wc2, bc2)


def reference(dist_feat_nchw, params):
    """Pure-JAX (f32) reference of the same forward, for a sanity check."""
    wd1, bd1, wd2, bd2, wc1, bc1, wc2, bc2 = params
    pooled = jnp.mean(dist_feat_nchw, axis=(2, 3))
    hd = _leaky_relu(pooled @ wd1 + bd1)
    disc = jax.nn.sigmoid(hd @ wd2 + bd2).reshape(-1)
    hc = _leaky_relu(pooled @ wc1 + bc1)
    cls = hc @ wc2 + bc2
    return disc, cls


if __name__ == "__main__":
    key = jax.random.PRNGKey(0)
    k_feat, k_params = jax.random.split(key)

    # Small shapes consistent with the module: batch=2, last-level channels=32,
    # spatial 8x8, hidden=512, num_classes=116.
    B, C, Himg, Wimg = 2, 32, 8, 8
    HIDDEN, NUM_CLASSES = 512, 116

    dist_feat = jax.random.normal(k_feat, (B, C, Himg, Wimg), jnp.float32)
    params = init_params(k_params, input_dim=C, hidden_dim=HIDDEN,
                         num_classes=NUM_CLASSES)
    fused = fuse_head_params(params)

    disc_out, cls_out = multitask_heads(dist_feat, fused, num_classes=NUM_CLASSES)
    disc_out = jax.block_until_ready(disc_out)
    cls_out = jax.block_until_ready(cls_out)

    disc_ref, cls_ref = reference(dist_feat, params)
    assert disc_out.shape == (B,)
    assert cls_out.shape == (B, NUM_CLASSES)
    # bf16 MXU operands -> compare against the f32 reference at bf16-level tolerance.
    assert jnp.allclose(disc_out, disc_ref, atol=1e-2, rtol=1e-2)
    assert jnp.allclose(cls_out, cls_ref, atol=1e-2, rtol=1e-2)

    print("KERNEL_OK")
</pallas_src>

<mosaic_0001>
module attributes {stable_mosaic.version = 11 : i64} {
  func.func @multitask_heads_kernel(%arg0: memref<128x32xbf16, #tpu.memory_space<vmem>>, %arg1: memref<2x128xf32, #tpu.memory_space<vmem>>, %arg2: memref<32x1024xbf16, #tpu.memory_space<vmem>>, %arg3: memref<1x1024xf32, #tpu.memory_space<vmem>>, %arg4: memref<1024x128xbf16, #tpu.memory_space<vmem>>, %arg5: memref<1x128xf32, #tpu.memory_space<vmem>>, %arg6: memref<2x128xf32, #tpu.memory_space<vmem>>) attributes {dimension_semantics = [], scalar_prefetch = 0 : i64, scratch_operands = 0 : i64, tpu.core_type = #tpu.core_type<tc>} {
    %c0 = arith.constant 0 : index
    %c0_0 = arith.constant 0 : index
    %0 = vector.load %arg0[%c0, %c0_0] : memref<128x32xbf16, #tpu.memory_space<vmem>>, vector<128x32xbf16>
    %c0_1 = arith.constant 0 : index
    %c0_2 = arith.constant 0 : index
    %1 = vector.load %arg2[%c0_1, %c0_2] : memref<32x1024xbf16, #tpu.memory_space<vmem>>, vector<32x1024xbf16>
    %cst = arith.constant dense<0.000000e+00> : vector<128x1024xf32>
    %2 = tpu.matmul %0, %1, %cst {dimension_numbers = #tpu.dot_dimension_numbers<[1], [0], [0], [1], [0, 0, 1, 1], [], []>} : vector<128x32xbf16>, vector<32x1024xbf16>, vector<128x1024xf32> -> vector<128x1024xf32>
    %c0_3 = arith.constant 0 : index
    %c0_4 = arith.constant 0 : index
    %3 = vector.load %arg1[%c0_3, %c0_4] : memref<2x128xf32, #tpu.memory_space<vmem>>, vector<2x128xf32>
    %cst_5 = arith.constant dense<0.000000e+00> : vector<2x1024xf32>
    %4 = tpu.matmul %3, %2, %cst_5 {dimension_numbers = #tpu.dot_dimension_numbers<[1], [0], [0], [1], [0, 0, 1, 1], [], []>} : vector<2x128xf32>, vector<128x1024xf32>, vector<2x1024xf32> -> vector<2x1024xf32>
    %c0_6 = arith.constant 0 : index
    %c0_7 = arith.constant 0 : index
    %5 = vector.load %arg3[%c0_6, %c0_7] : memref<1x1024xf32, #tpu.memory_space<vmem>>, vector<1x1024xf32>
    %6 = vector.broadcast %5 : vector<1x1024xf32> to vector<2x1024xf32>
    %7 = arith.addf %4, %6 : vector<2x1024xf32>
    %cst_8 = arith.constant 0.000000e+00 : f32
    %8 = vector.broadcast %cst_8 : f32 to vector<2x1024xf32>
    %9 = arith.cmpf ogt, %7, %8 : vector<2x1024xf32>
    %cst_9 = arith.constant 0.00999999977 : f32
    %10 = vector.broadcast %cst_9 : f32 to vector<2x1024xf32>
    %11 = arith.mulf %10, %7 : vector<2x1024xf32>
    %12 = arith.select %9, %7, %11 : vector<2x1024xi1>, vector<2x1024xf32>
    %13 = arith.truncf %12 : vector<2x1024xf32> to vector<2x1024xbf16>
    %c0_10 = arith.constant 0 : index
    %c0_11 = arith.constant 0 : index
    %14 = vector.load %arg4[%c0_10, %c0_11] : memref<1024x128xbf16, #tpu.memory_space<vmem>>, vector<1024x128xbf16>
    %cst_12 = arith.constant dense<0.000000e+00> : vector<2x128xf32>
    %15 = tpu.matmul %13, %14, %cst_12 {dimension_numbers = #tpu.dot_dimension_numbers<[1], [0], [0], [1], [0, 0, 1, 1], [], []>} : vector<2x1024xbf16>, vector<1024x128xbf16>, vector<2x128xf32> -> vector<2x128xf32>
    %c0_13 = arith.constant 0 : index
    %c0_14 = arith.constant 0 : index
    %16 = vector.load %arg5[%c0_13, %c0_14] : memref<1x128xf32, #tpu.memory_space<vmem>>, vector<1x128xf32>
    %17 = vector.broadcast %16 : vector<1x128xf32> to vector<2x128xf32>
    %18 = arith.addf %15, %17 : vector<2x128xf32>
    %19 = tpu.iota {dimensions = array<i32: 1>} : vector<2x128xi32>
    %c0_i32 = arith.constant 0 : i32
    %20 = vector.broadcast %c0_i32 : i32 to vector<2x128xi32>
    %21 = arith.cmpi eq, %19, %20 : vector<2x128xi32>
    %22 = arith.negf %18 : vector<2x128xf32>
    %23 = math.exp %22 : vector<2x128xf32>
    %cst_15 = arith.constant 1.000000e+00 : f32
    %24 = vector.broadcast %cst_15 : f32 to vector<2x128xf32>
    %25 = arith.addf %24, %23 : vector<2x128xf32>
    %26 = arith.divf %24, %25 : vector<2x128xf32>
    %27 = arith.select %21, %26, %18 : vector<2x128xi1>, vector<2x128xf32>
    %c0_16 = arith.constant 0 : index
    %c0_17 = arith.constant 0 : index
    %28 = vector.load %arg6[%c0_16, %c0_17] : memref<2x128xf32, #tpu.memory_space<vmem>>, vector<2x128xf32>
    tpu.vector_store %arg6[%c0_16, %c0_17], %27 {strides = array<i32>} : memref<2x128xf32, #tpu.memory_space<vmem>>, vector<2x128xf32>,
    return
  }
}

</mosaic_0001>

<llo_original>
// kernel: multitask_heads.1
$region0: #{multitask_heads.1}
  #allocation0 [shape = 'u32[]', space=smem, size = 0x4, offset = 0x4, fixed_abs, tag = 'smem constant byte address 0x4 - core index']
  #allocation1 [shape = 'u32[144,128]{1,0:T(1,128)}', space=vmem, size = 0x12000, scoped, tag = 'internal scratch']
  %s0 = inlined_call_operand.vmem [shape: bf16[128,32], index: 0, kind: input, shape index: {}]
  %s1 = inlined_call_operand.vmem [shape: f32[2,128], index: 1, kind: input, shape index: {}]
  %s2 = inlined_call_operand.vmem [shape: bf16[32,1024], index: 2, kind: input, shape index: {}]
  %s3 = inlined_call_operand.vmem [shape: f32[1,1024], index: 3, kind: input, shape index: {}]
  %s4 = inlined_call_operand.hbm [shape: bf16[1024,128], index: 4, kind: input, shape index: {}]
  %s5 = inlined_call_operand.vmem [shape: f32[1,128], index: 5, kind: input, shape index: {}]
  %s6 = inlined_call_operand.vmem [shape: f32[2,128], index: 6, kind: output, shape index: {}]
  %s7 = sld [smem:[#allocation0]]
  $region38: #{multitask_heads.1} parent=0
    _
  %s9 = ssub.s32 1, %s7
  %s10 = scalar_select 0, %s9, %s7
  $region1: #{multitask_heads.1} parent=0
    #allocation2 [shape = 'u8[262144]{0}', space=vmem, size = 0x40000, scoped, tag = 'input window, operand 4, single buffered']
    #allocation3 [shape = 's32[1]{0}', space=sflag, size = 0x4, scoped, tag = 'scoped memory for multitask_heads.1']
    %11 = vsyncpa [#allocation3], 0
    // Predicated region
    $region2: #{multitask_heads.1} parent=1 // pred_check
      _
    $region3: #{multitask_heads.1} parent=1 // pred_check_branch
      %13 = sbr.rel (0) target = $region5
    $region4: #{multitask_heads.1} parent=1 // pred_region
      _
    $region5: #{multitask_heads.1} parent=1 // pred_fallthru
      _
    // Predicated region
    $region6: #{multitask_heads.1} parent=1 // pred_check
      _
    $region7: #{multitask_heads.1} parent=1 // pred_check_branch
      %15 = sbr.rel (0) target = $region9
    $region8: #{multitask_heads.1} parent=1 // pred_region
      _
    $region9: #{multitask_heads.1} parent=1 // pred_fallthru
      _
    // Predicated region
    $region10: #{multitask_heads.1} parent=1 // pred_check
      _
    $region11: #{multitask_heads.1} parent=1 // pred_check_branch
      %17 = sbr.rel (0) target = $region13
    $region12: #{multitask_heads.1} parent=1 // pred_region
      _
    $region13: #{multitask_heads.1} parent=1 // pred_fallthru
      _
    // Predicated region
    $region14: #{multitask_heads.1} parent=1 // pred_check
      _
    $region15: #{multitask_heads.1} parent=1 // pred_check_branch
      %19 = sbr.rel (0) target = $region17
    $region16: #{multitask_heads.1} parent=1 // pred_region
      _
    $region17: #{multitask_heads.1} parent=1 // pred_fallthru
      _
    // Predicated region
    $region18: #{multitask_heads.1} parent=1 // pred_check
      _
    $region19: #{multitask_heads.1} parent=1 // pred_check_branch
      %21 = sbr.rel (0) target = $region21
    $region20: #{multitask_heads.1} parent=1 // pred_region
      %s23 = ssub.s32 8192, 8192
      %24 = vsyncadd [#allocation3], %s23
      %s25 = sshll.u32 [#allocation2], 4
      %s26 = int_to_ptr.vmem [resolvable:$true] %s25
      %31 = dma.hbm_to_vmem [thread:$0]  %s4, 8192, %s26, [#allocation3], 64, 64, 4
    $region21: #{multitask_heads.1} parent=1 // pred_fallthru
      _
    // Predicated region
    $region22: #{multitask_heads.1} parent=1 // pred_check
      _
    $region23: #{multitask_heads.1} parent=1 // pred_check_branch
      %33 = sbr.rel (0) target = $region25
    $region24: #{multitask_heads.1} parent=1 // pred_region
      _
    $region25: #{multitask_heads.1} parent=1 // pred_fallthru
      _
    // Predicated region
    $region26: #{multitask_heads.1} parent=1 // pred_check
      _
    $region27: #{multitask_heads.1} parent=1 // pred_check_branch
      %35 = sbr.rel (0) target = $region29
    $region28: #{multitask_heads.1} parent=1 // pred_region
      %36 = dma.done [#allocation3], 8192
    $region29: #{multitask_heads.1} parent=1 // pred_fallthru
      _
    %v38 = vld [vmem:[%s0] sm:$0xf]
    %v39 = vld [vmem:[%s0 + $0x4] sm:$0xf]
    %v40 = vld [vmem:[%s0 + $0x8] sm:$0xf]
    %v41 = vld [vmem:[%s0 + $0xc] sm:$0xf]
    %v42 = vld [vmem:[%s0 + $0x10] sm:$0xf]
    %v43 = vld [vmem:[%s0 + $0x14] sm:$0xf]
    %v44 = vld [vmem:[%s0 + $0x18] sm:$0xf]
    %v45 = vld [vmem:[%s0 + $0x1c] sm:$0xf]
    %v46 = vld [vmem:[%s0 + $0x20] sm:$0xf]
    %v47 = vld [vmem:[%s0 + $0x24] sm:$0xf]
    %v48 = vld [vmem:[%s0 + $0x28] sm:$0xf]
    %v49 = vld [vmem:[%s0 + $0x2c] sm:$0xf]
    %v50 = vld [vmem:[%s0 + $0x30] sm:$0xf]
    %v51 = vld [vmem:[%s0 + $0x34] sm:$0xf]
    %v52 = vld [vmem:[%s0 + $0x38] sm:$0xf]
    %v53 = vld [vmem:[%s0 + $0x3c] sm:$0xf]
    %v54 = vld [vmem:[%s2] sm:$0xff]
    %v55 = vld [vmem:[%s2 + $0x8] sm:$0xff]
    %v56 = vld [vmem:[%s2 + $0x10] sm:$0xff]
    %v57 = vld [vmem:[%s2 + $0x18] sm:$0xff]
    %v58 = vld [vmem:[%s2 + $0x20] sm:$0xff]
    %v59 = vld [vmem:[%s2 + $0x28] sm:$0xff]
    %v60 = vld [vmem:[%s2 + $0x30] sm:$0xff]
    %v61 = vld [vmem:[%s2 + $0x38] sm:$0xff]
    %v62 = vld [vmem:[%s2 + $0x40] sm:$0xff]
    %v63 = vld [vmem:[%s2 + $0x48] sm:$0xff]
    %v64 = vld [vmem:[%s2 + $0x50] sm:$0xff]
    %v65 = vld [vmem:[%s2 + $0x58] sm:$0xff]
    %v66 = vld [vmem:[%s2 + $0x60] sm:$0xff]
    %v67 = vld [vmem:[%s2 + $0x68] sm:$0xff]
    %v68 = vld [vmem:[%s2 + $0x70] sm:$0xff]
    %v69 = vld [vmem:[%s2 + $0x78] sm:$0xff]
    %v86 = vunpack.c.l.b16 %v38
    %v87 = vunpack.c.l.b16 %v39
    %v88 = vunpack.c.l.b16 %v40
    %v89 = vunpack.c.l.b16 %v41
    %v90 = vunpack.c.l.b16 %v42
    %v91 = vunpack.c.l.b16 %v43
    %v92 = vunpack.c.l.b16 %v44
    %v93 = vunpack.c.l.b16 %v45
    %v94 = vunpack.c.l.b16 %v46
    %v95 = vunpack.c.l.b16 %v47
    %v96 = vunpack.c.l.b16 %v48
    %v97 = vunpack.c.l.b16 %v49
    %v98 = vunpack.c.l.b16 %v50
    %v99 = vunpack.c.l.b16 %v51
    %v100 = vunpack.c.l.b16 %v52
    %v101 = vunpack.c.l.b16 %v53
    %v102 = vpack.c.b16 %v87, %v86
    %v103 = vpack.c.b16 %v89, %v88
    %v104 = vpack.c.b16 %v91, %v90
    %v105 = vpack.c.b16 %v93, %v92
    %v106 = vpack.c.b16 %v95, %v94
    %v107 = vpack.c.b16 %v97, %v96
    %v108 = vpack.c.b16 %v99, %v98
    %v109 = vpack.c.b16 %v101, %v100
    %v126 = vunpack.c.l.b16 %v54
    %v127 = vunpack.c.h.b16 %v54
    %v128 = vunpack.c.l.b16 %v55
    %v129 = vunpack.c.h.b16 %v55
    %v130 = vunpack.c.l.b16 %v56
    %v131 = vunpack.c.h.b16 %v56
    %v132 = vunpack.c.l.b16 %v57
    %v133 = vunpack.c.h.b16 %v57
    %v134 = vunpack.c.l.b16 %v58
    %v135 = vunpack.c.h.b16 %v58
    %v136 = vunpack.c.l.b16 %v59
    %v137 = vunpack.c.h.b16 %v59
    %v138 = vunpack.c.l.b16 %v60
    %v139 = vunpack.c.h.b16 %v60
    %v140 = vunpack.c.l.b16 %v61
    %v141 = vunpack.c.h.b16 %v61
    %v142 = vunpack.c.l.b16 %v62
    %v143 = vunpack.c.h.b16 %v62
    %v144 = vunpack.c.l.b16 %v63
    %v145 = vunpack.c.h.b16 %v63
    %v146 = vunpack.c.l.b16 %v64
    %v147 = vunpack.c.h.b16 %v64
    %v148 = vunpack.c.l.b16 %v65
    %v149 = vunpack.c.h.b16 %v65
    %v150 = vunpack.c.l.b16 %v66
    %v151 = vunpack.c.h.b16 %v66
    %v152 = vunpack.c.l.b16 %v67
    %v153 = vunpack.c.h.b16 %v67
    %v154 = vunpack.c.l.b16 %v68
    %v155 = vunpack.c.h.b16 %v68
    %v156 = vunpack.c.l.b16 %v69
    %v157 = vunpack.c.h.b16 %v69
    %v158 = vpack.c.b16 %v134, %v126
    %v159 = vpack.c.b16 %v135, %v127
    %v160 = vpack.c.b16 %v136, %v128
    %v161 = vpack.c.b16 %v137, %v129
    %v162 = vpack.c.b16 %v138, %v130
    %v163 = vpack.c.b16 %v139, %v131
    %v164 = vpack.c.b16 %v140, %v132
    %v165 = vpack.c.b16 %v141, %v133
    %v166 = vpack.c.b16 %v150, %v142
    %v167 = vpack.c.b16 %v151, %v143
    %v168 = vpack.c.b16 %v152, %v144
    %v169 = vpack.c.b16 %v153, %v145
    %v170 = vpack.c.b16 %v154, %v146
    %v171 = vpack.c.b16 %v155, %v147
    %v172 = vpack.c.b16 %v156, %v148
    %v173 = vpack.c.b16 %v157, %v149
    %vm190 = vcmask 261120
    %v192 = vsel %vm190, %v102, 0
    %v195 = vsel %vm190, %v103, 0
    %v198 = vsel %vm190, %v104, 0
    %v201 = vsel %vm190, %v105, 0
    %v204 = vsel %vm190, %v106, 0
    %v207 = vsel %vm190, %v107, 0
    %v210 = vsel %vm190, %v108, 0
    %v213 = vsel %vm190, %v109, 0
    %215 = vmatprep.subr.bf16.mxu0 %v159
    %216 = vmatpush1.bf16.msra.mxu0 %v158
    %217 = vmatprep.subr.bf16.mxu0 %v167
    %218 = vmatpush1.bf16.msra.mxu0 %v166
    %219 = vmatprep.subr.bf16.mxu0 0
    %220 = vmatpush1.bf16.msra.mxu0 0
    %221 = vmatprep.subr.bf16.mxu0 0
    %222 = vmatpush1.bf16.msra.mxu0 0
    %223 = vmatprep.subr.bf16.mxu0 0
    %224 = vmatpush1.bf16.msra.mxu0 0
    %225 = vmatprep.subr.bf16.mxu0 0
    %226 = vmatpush1.bf16.msra.mxu0 0
    %227 = vmatprep.subr.bf16.mxu0 0
    %228 = vmatpush1.bf16.msra.mxu0 0
    %229 = vmatprep.subr.bf16.mxu0 0
    %230 = vmatpush1.bf16.msra.mxu0 0
    %231 = vmatprep.subr.bf16.mxu0 0
    %232 = vmatpush1.bf16.msra.mxu0 0
    %233 = vmatprep.subr.bf16.mxu0 0
    %234 = vmatpush1.bf16.msra.mxu0 0
    %235 = vmatprep.subr.bf16.mxu0 0
    %236 = vmatpush1.bf16.msra.mxu0 0
    %237 = vmatprep.subr.bf16.mxu0 0
    %238 = vmatpush1.bf16.msra.mxu0 0
    %239 = vmatprep.subr.bf16.mxu0 0
    %240 = vmatpush1.bf16.msra.mxu0 0
    %241 = vmatprep.subr.bf16.mxu0 0
    %242 = vmatpush1.bf16.msra.mxu0 0
    %243 = vmatprep.subr.bf16.mxu0 0
    %244 = vmatpush1.bf16.msra.mxu0 0
    %245 = vmatprep.subr.bf16.mxu0 0
    %246 = vmatpush1.bf16.msra.mxu0 0
    %247 = vmatprep.mubr.bf16.mxu0 0
    %248 = vmatmul.mubr.bf16.gmra.mrb[0].mxu0 %v192
    %v249 = vpop.f32.mrb[0].mxu0
    %v250 = vadd.f32 0.0, %v249
    %v251 = vpop.f32.mrb[0].mxu0
    %v252 = vadd.f32 0.0, %v251
    %v253 = vpop.f32.mrb[0].mxu0
    %v254 = vadd.f32 0.0, %v253
    %v255 = vpop.f32.mrb[0].mxu0
    %v256 = vadd.f32 0.0, %v255
    %257 = vmatprep.mubr.bf16.mxu0 0
    %258 = vmatmul.mubr.bf16.gmra.mrb[0].mxu0 %v195
    %v259 = vpop.f32.mrb[0].mxu0
    %v260 = vadd.f32 0.0, %v259
    %v261 = vpop.f32.mrb[0].mxu0
    %v262 = vadd.f32 0.0, %v261
    %v263 = vpop.f32.mrb[0].mxu0
    %v264 = vadd.f32 0.0, %v263
    %v265 = vpop.f32.mrb[0].mxu0
    %v266 = vadd.f32 0.0, %v265
    %267 = vmatprep.mubr.bf16.mxu0 0
    %268 = vmatmul.mubr.bf16.gmra.mrb[0].mxu0 %v198
    %v269 = vpop.f32.mrb[0].mxu0
    %v270 = vadd.f32 0.0, %v269
    %v271 = vpop.f32.mrb[0].mxu0
    %v272 = vadd.f32 0.0, %v271
    %v273 = vpop.f32.mrb[0].mxu0
    %v274 = vadd.f32 0.0, %v273
    %v275 = vpop.f32.mrb[0].mxu0
    %v276 = vadd.f32 0.0, %v275
    %277 = vmatprep.mubr.bf16.mxu0 0
    %278 = vmatmul.mubr.bf16.gmra.mrb[0].mxu0 %v201
    %v279 = vpop.f32.mrb[0].mxu0
    %v280 = vadd.f32 0.0, %v279
    %v281 = vpop.f32.mrb[0].mxu0
    %v282 = vadd.f32 0.0, %v281
    %v283 = vpop.f32.mrb[0].mxu0
    %v284 = vadd.f32 0.0, %v283
    %v285 = vpop.f32.mrb[0].mxu0
    %v286 = vadd.f32 0.0, %v285
    %287 = vmatprep.mubr.bf16.mxu0 0
    %288 = vmatmul.mubr.bf16.gmra.mrb[0].mxu0 %v204
    %v289 = vpop.f32.mrb[0].mxu0
    %v290 = vadd.f32 0.0, %v289
    %v291 = vpop.f32.mrb[0].mxu0
    %v292 = vadd.f32 0.0, %v291
    %v293 = vpop.f32.mrb[0].mxu0
    %v294 = vadd.f32 0.0, %v293
    %v295 = vpop.f32.mrb[0].mxu0
    %v296 = vadd.f32 0.0, %v295
    %297 = vmatprep.mubr.bf16.mxu0 0
    %298 = vmatmul.mubr.bf16.gmra.mrb[0].mxu0 %v207
    %v299 = vpop.f32.mrb[0].mxu0
    %v300 = vadd.f32 0.0, %v299
    %v301 = vpop.f32.mrb[0].mxu0
    %v302 = vadd.f32 0.0, %v301
    %v303 = vpop.f32.mrb[0].mxu0
    %v304 = vadd.f32 0.0, %v303
    %v305 = vpop.f32.mrb[0].mxu0
    %v306 = vadd.f32 0.0, %v305
    %307 = vmatprep.mubr.bf16.mxu0 0
    %308 = vmatmul.mubr.bf16.gmra.mrb[0].mxu0 %v210
    %v309 = vpop.f32.mrb[0].mxu0
    %v310 = vadd.f32 0.0, %v309
    %v311 = vpop.f32.mrb[0].mxu0
    %v312 = vadd.f32 0.0, %v311
    %v313 = vpop.f32.mrb[0].mxu0
    %v314 = vadd.f32 0.0, %v313
    %v315 = vpop.f32.mrb[0].mxu0
    %v316 = vadd.f32 0.0, %v315
    %317 = vmatprep.mubr.bf16.mxu0 0
    %318 = vmatmul.mubr.bf16.gmra.mrb[0].mxu0 %v213
    %v319 = vpop.f32.mrb[0].mxu0
    %v320 = vadd.f32 0.0, %v319
    %v321 = vpop.f32.mrb[0].mxu0
    %v322 = vadd.f32 0.0, %v321
    %v323 = vpop.f32.mrb[0].mxu0
    %v324 = vadd.f32 0.0, %v323
    %v325 = vpop.f32.mrb[0].mxu0
    %v326 = vadd.f32 0.0, %v325
    %327 = vdwg.mxu0
    %328 = vmatprep.subr.bf16.mxu0 %v161
    %329 = vmatpush1.bf16.msra.mxu0 %v160
    %330 = vmatprep.subr.bf16.mxu0 %v169
    %331 = vmatpush1.bf16.msra.mxu0 %v168
    %332 = vmatprep.subr.bf16.mxu0 0
    %333 = vmatpush1.bf16.msra.mxu0 0
    %334 = vmatprep.subr.bf16.mxu0 0
    %335 = vmatpush1.bf16.msra.mxu0 0
    %336 = vmatprep.subr.bf16.mxu0 0
    %337 = vmatpush1.bf16.msra.mxu0 0
    %338 = vmatprep.subr.bf16.mxu0 0
    %339 = vmatpush1.bf16.msra.mxu0 0
    %340 = vmatprep.subr.bf16.mxu0 0
    %341 = vmatpush1.bf16.msra.mxu0 0
    %342 = vmatprep.subr.bf16.mxu0 0
    %343 = vmatpush1.bf16.msra.mxu0 0
    %344 = vmatprep.subr.bf16.mxu0 0
    %345 = vmatpush1.bf16.msra.mxu0 0
    %346 = vmatprep.subr.bf16.mxu0 0
    %347 = vmatpush1.bf16.msra.mxu0 0
    %348 = vmatprep.subr.bf16.mxu0 0
    %349 = vmatpush1.bf16.msra.mxu0 0
    %350 = vmatprep.subr.bf16.mxu0 0
    %351 = vmatpush1.bf16.msra.mxu0 0
    %352 = vmatprep.subr.bf16.mxu0 0
    %353 = vmatpush1.bf16.msra.mxu0 0
    %354 = vmatprep.subr.bf16.mxu0 0
    %355 = vmatpush1.bf16.msra.mxu0 0
    %356 = vmatprep.subr.bf16.mxu0 0
    %357 = vmatpush1.bf16.msra.mxu0 0
    %358 = vmatprep.subr.bf16.mxu0 0
    %359 = vmatpush1.bf16.msra.mxu0 0
    %360 = vmatprep.mubr.bf16.mxu0 0
    %361 = vmatmul.mubr.bf16.gmra.mrb[0].mxu0 %v192
    %v362 = vpop.f32.mrb[0].mxu0
    %v363 = vadd.f32 0.0, %v362
    %v364 = vpop.f32.mrb[0].mxu0
    %v365 = vadd.f32 0.0, %v364
    %v366 = vpop.f32.mrb[0].mxu0
    %v367 = vadd.f32 0.0, %v366
    %v368 = vpop.f32.mrb[0].mxu0
    %v369 = vadd.f32 0.0, %v368
    %370 = vmatprep.mubr.bf16.mxu0 0
    %371 = vmatmul.mubr.bf16.gmra.mrb[0].mxu0 %v195
    %v372 = vpop.f32.mrb[0].mxu0
    %v373 = vadd.f32 0.0, %v372
    %v374 = vpop.f32.mrb[0].mxu0
    %v375 = vadd.f32 0.0, %v374
    %v376 = vpop.f32.mrb[0].mxu0
    %v377 = vadd.f32 0.0, %v376
    %v378 = vpop.f32.mrb[0].mxu0
    %v379 = vadd.f32 0.0, %v378
    %380 = vmatprep.mubr.bf16.mxu0 0
    %381 = vmatmul.mubr.bf16.gmra.mrb[0].mxu0 %v198
    %v382 = vpop.f32.mrb[0].mxu0
    %v383 = vadd.f32 0.0, %v382
    %v384 = vpop.f32.mrb[0].mxu0
    %v385 = vadd.f32 0.0, %v384
    %v386 = vpop.f32.mrb[0].mxu0
    %v387 = vadd.f32 0.0, %v386
    %v388 = vpop.f32.mrb[0].mxu0
    %v389 = vadd.f32 0.0, %v388
    %390 = vmatprep.mubr.bf16.mxu0 0
    %391 = vmatmul.mubr.bf16.gmra.mrb[0].mxu0 %v201
    %v392 = vpop.f32.mrb[0].mxu0
    %v393 = vadd.f32 0.0, %v392
    %v394 = vpop.f32.mrb[0].mxu0
    %v395 = vadd.f32 0.0, %v394
    %v396 = vpop.f32.mrb[0].mxu0
    %v397 = vadd.f32 0.0, %v396
    %v398 = vpop.f32.mrb[0].mxu0
    %v399 = vadd.f32 0.0, %v398
    %400 = vmatprep.mubr.bf16.mxu0 0
    %401 = vmatmul.mubr.bf16.gmra.mrb[0].mxu0 %v204
    %v402 = vpop.f32.mrb[0].mxu0
    %v403 = vadd.f32 0.0, %v402
    %v404 = vpop.f32.mrb[0].mxu0
    %v405 = vadd.f32 0.0, %v404
    %v406 = vpop.f32.mrb[0].mxu0
    %v407 = vadd.f32 0.0, %v406
    %v408 = vpop.f32.mrb[0].mxu0
    %v409 = vadd.f32 0.0, %v408
    %410 = vmatprep.mubr.bf16.mxu0 0
    %411 = vmatmul.mubr.bf16.gmra.mrb[0].mxu0 %v207
    %v412 = vpop.f32.mrb[0].mxu0
    %v413 = vadd.f32 0.0, %v412
    %v414 = vpop.f32.mrb[0].mxu0
    %v415 = vadd.f32 0.0, %v414
    %v416 = vpop.f32.mrb[0].mxu0
    %v417 = vadd.f32 0.0, %v416
    %v418 = vpop.f32.mrb[0].mxu0
    %v419 = vadd.f32 0.0, %v418
    %420 = vmatprep.mubr.bf16.mxu0 0
    %421 = vmatmul.mubr.bf16.gmra.mrb[0].mxu0 %v210
    %v422 = vpop.f32.mrb[0].mxu0
    %v423 = vadd.f32 0.0, %v422
    %v424 = vpop.f32.mrb[0].mxu0
    %v425 = vadd.f32 0.0, %v424
    %v426 = vpop.f32.mrb[0].mxu0
    %v427 = vadd.f32 0.0, %v426
    %v428 = vpop.f32.mrb[0].mxu0
    %v429 = vadd.f32 0.0, %v428
    %430 = vmatprep.mubr.bf16.mxu0 0
    %431 = vmatmul.mubr.bf16.gmra.mrb[0].mxu0 %v213
    %v432 = vpop.f32.mrb[0].mxu0
    %v433 = vadd.f32 0.0, %v432
    %v434 = vpop.f32.mrb[0].mxu0
    %v435 = vadd.f32 0.0, %v434
    %v436 = vpop.f32.mrb[0].mxu0
    %v437 = vadd.f32 0.0, %v436
    %v438 = vpop.f32.mrb[0].mxu0
    %v439 = vadd.f32 0.0, %v438
    %440 = vdwg.mxu0
    %441 = vmatprep.subr.bf16.mxu0 %v163
    %442 = vmatpush1.bf16.msra.mxu0 %v162
    %443 = vmatprep.subr.bf16.mxu0 %v171
    %444 = vmatpush1.bf16.msra.mxu0 %v170
    %445 = vmatprep.subr.bf16.mxu0 0
    %446 = vmatpush1.bf16.msra.mxu0 0
    %447 = vmatprep.subr.bf16.mxu0 0
    %448 = vmatpush1.bf16.msra.mxu0 0
    %449 = vmatprep.subr.bf16.mxu0 0
    %450 = vmatpush1.bf16.msra.mxu0 0
    %451 = vmatprep.subr.bf16.mxu0 0
    %452 = vmatpush1.bf16.msra.mxu0 0
    %453 = vmatprep.subr.bf16.mxu0 0
    %454 = vmatpush1.bf16.msra.mxu0 0
    %455 = vmatprep.subr.bf16.mxu0 0
    %456 = vmatpush1.bf16.msra.mxu0 0
    %457 = vmatprep.subr.bf16.mxu0 0
    %458 = vmatpush1.bf16.msra.mxu0 0
    %459 = vmatprep.subr.bf16.mxu0 0
    %460 = vmatpush1.bf16.msra.mxu0 0
    %461 = vmatprep.subr.bf16.mxu0 0
    %462 = vmatpush1.bf16.msra.mxu0 0
    %463 = vmatprep.subr.bf16.mxu0 0
    %464 = vmatpush1.bf16.msra.mxu0 0
    %465 = vmatprep.subr.bf16.mxu0 0
    %466 = vmatpush1.bf16.msra.mxu0 0
    %467 = vmatprep.subr.bf16.mxu0 0
    %468 = vmatpush1.bf16.msra.mxu0 0
    %469 = vmatprep.subr.bf16.mxu0 0
    %470 = vmatpush1.bf16.msra.mxu0 0
    %471 = vmatprep.subr.bf16.mxu0 0
    %472 = vmatpush1.bf16.msra.mxu0 0
    %473 = vmatprep.mubr.bf16.mxu0 0
    %474 = vmatmul.mubr.bf16.gmra.mrb[0].mxu0 %v192
    %v475 = vpop.f32.mrb[0].mxu0
    %v476 = vadd.f32 0.0, %v475
    %v477 = vpop.f32.mrb[0].mxu0
    %v478 = vadd.f32 0.0, %v477
    %v479 = vpop.f32.mrb[0].mxu0
    %v480 = vadd.f32 0.0, %v479
    %v481 = vpop.f32.mrb[0].mxu0
    %v482 = vadd.f32 0.0, %v481
    %483 = vmatprep.mubr.bf16.mxu0 0
    %484 = vmatmul.mubr.bf16.gmra.mrb[0].mxu0 %v195
    %v485 = vpop.f32.mrb[0].mxu0
    %v486 = vadd.f32 0.0, %v485
    %v487 = vpop.f32.mrb[0].mxu0
    %v488 = vadd.f32 0.0, %v487
    %v489 = vpop.f32.mrb[0].mxu0
    %v490 = vadd.f32 0.0, %v489
    %v491 = vpop.f32.mrb[0].mxu0
    %v492 = vadd.f32 0.0, %v491
    %493 = vmatprep.mubr.bf16.mxu0 0
    %494 = vmatmul.mubr.bf16.gmra.mrb[0].mxu0 %v198
    %v495 = vpop.f32.mrb[0].mxu0
    %v496 = vadd.f32 0.0, %v495
    %v497 = vpop.f32.mrb[0].mxu0
    %v498 = vadd.f32 0.0, %v497
    %v499 = vpop.f32.mrb[0].mxu0
    %v500 = vadd.f32 0.0, %v499
    %v501 = vpop.f32.mrb[0].mxu0
    %v502 = vadd.f32 0.0, %v501
    %503 = vmatprep.mubr.bf16.mxu0 0
    %504 = vmatmul.mubr.bf16.gmra.mrb[0].mxu0 %v201
    %v505 = vpop.f32.mrb[0].mxu0
    %v506 = vadd.f32 0.0, %v505
    %v507 = vpop.f32.mrb[0].mxu0
    %v508 = vadd.f32 0.0, %v507
    %v509 = vpop.f32.mrb[0].mxu0
    %v510 = vadd.f32 0.0, %v509
    %v511 = vpop.f32.mrb[0].mxu0
    %v512 = vadd.f32 0.0, %v511
    %513 = vmatprep.mubr.bf16.mxu0 0
    %514 = vmatmul.mubr.bf16.gmra.mrb[0].mxu0 %v204
    %v515 = vpop.f32.mrb[0].mxu0
    %v516 = vadd.f32 0.0, %v515
    %v517 = vpop.f32.mrb[0].mxu0
    %v518 = vadd.f32 0.0, %v517
    %v519 = vpop.f32.mrb[0].mxu0
    %v520 = vadd.f32 0.0, %v519
    %v521 = vpop.f32.mrb[0].mxu0
    %v522 = vadd.f32 0.0, %v521
    %523 = vmatprep.mubr.bf16.mxu0 0
    %524 = vmatmul.mubr.bf16.gmra.mrb[0].mxu0 %v207
    %v525 = vpop.f32.mrb[0].mxu0
    %v526 = vadd.f32 0.0, %v525
    %v527 = vpop.f32.mrb[0].mxu0
    %v528 = vadd.f32 0.0, %v527
    %v529 = vpop.f32.mrb[0].mxu0
    %v530 = vadd.f32 0.0, %v529
    %v531 = vpop.f32.mrb[0].mxu0
    %v532 = vadd.f32 0.0, %v531
    %533 = vmatprep.mubr.bf16.mxu0 0
    %534 = vmatmul.mubr.bf16.gmra.mrb[0].mxu0 %v210
    %v535 = vpop.f32.mrb[0].mxu0
    %v536 = vadd.f32 0.0, %v535
    %v537 = vpop.f32.mrb[0].mxu0
    %v538 = vadd.f32 0.0, %v537
    %v539 = vpop.f32.mrb[0].mxu0
    %v540 = vadd.f32 0.0, %v539
    %v541 = vpop.f32.mrb[0].mxu0
    %v542 = vadd.f32 0.0, %v541
    %543 = vmatprep.mubr.bf16.mxu0 0
    %544 = vmatmul.mubr.bf16.gmra.mrb[0].mxu0 %v213
    %v545 = vpop.f32.mrb[0].mxu0
    %v546 = vadd.f32 0.0, %v545
    %v547 = vpop.f32.mrb[0].mxu0
    %v548 = vadd.f32 0.0, %v547
    %v549 = vpop.f32.mrb[0].mxu0
    %v550 = vadd.f32 0.0, %v549
    %v551 = vpop.f32.mrb[0].mxu0
    %v552 = vadd.f32 0.0, %v551
    %553 = vdwg.mxu0
    %554 = vmatprep.subr.bf16.mxu0 %v165
    %555 = vmatpush1.bf16.msra.mxu0 %v164
    %556 = vmatprep.subr.bf16.mxu0 %v173
    %557 = vmatpush1.bf16.msra.mxu0 %v172
    %558 = vmatprep.subr.bf16.mxu0 0
    %559 = vmatpush1.bf16.msra.mxu0 0
    %560 = vmatprep.subr.bf16.mxu0 0
    %561 = vmatpush1.bf16.msra.mxu0 0
    %562 = vmatprep.subr.bf16.mxu0 0
    %563 = vmatpush1.bf16.msra.mxu0 0
    %564 = vmatprep.subr.bf16.mxu0 0
    %565 = vmatpush1.bf16.msra.mxu0 0
    %566 = vmatprep.subr.bf16.mxu0 0
    %567 = vmatpush1.bf16.msra.mxu0 0
    %568 = vmatprep.subr.bf16.mxu0 0
    %569 = vmatpush1.bf16.msra.mxu0 0
    %570 = vmatprep.subr.bf16.mxu0 0
    %571 = vmatpush1.bf16.msra.mxu0 0
    %572 = vmatprep.subr.bf16.mxu0 0
    %573 = vmatpush1.bf16.msra.mxu0 0
    %574 = vmatprep.subr.bf16.mxu0 0
    %575 = vmatpush1.bf16.msra.mxu0 0
    %576 = vmatprep.subr.bf16.mxu0 0
    %577 = vmatpush1.bf16.msra.mxu0 0
    %578 = vmatprep.subr.bf16.mxu0 0
    %579 = vmatpush1.bf16.msra.mxu0 0
    %580 = vmatprep.subr.bf16.mxu0 0
    %581 = vmatpush1.bf16.msra.mxu0 0
    %582 = vmatprep.subr.bf16.mxu0 0
    %583 = vmatpush1.bf16.msra.mxu0 0
    %584 = vmatprep.subr.bf16.mxu0 0
    %585 = vmatpush1.bf16.msra.mxu0 0
    %586 = vmatprep.mubr.bf16.mxu0 0
    %587 = vmatmul.mubr.bf16.gmra.mrb[0].mxu0 %v192
    %v588 = vpop.f32.mrb[0].mxu0
    %v589 = vadd.f32 0.0, %v588
    %v590 = vpop.f32.mrb[0].mxu0
    %v591 = vadd.f32 0.0, %v590
    %v592 = vpop.f32.mrb[0].mxu0
    %v593 = vadd.f32 0.0, %v592
    %v594 = vpop.f32.mrb[0].mxu0
    %v595 = vadd.f32 0.0, %v594
    %596 = vmatprep.mubr.bf16.mxu0 0
    %597 = vmatmul.mubr.bf16.gmra.mrb[0].mxu0 %v195
    %v598 = vpop.f32.mrb[0].mxu0
    %v599 = vadd.f32 0.0, %v598
    %v600 = vpop.f32.mrb[0].mxu0
    %v601 = vadd.f32 0.0, %v600
    %v602 = vpop.f32.mrb[0].mxu0
    %v603 = vadd.f32 0.0, %v602
    %v604 = vpop.f32.mrb[0].mxu0
    %v605 = vadd.f32 0.0, %v604
    %606 = vmatprep.mubr.bf16.mxu0 0
    %607 = vmatmul.mubr.bf16.gmra.mrb[0].mxu0 %v198
    %v608 = vpop.f32.mrb[0].mxu0
    %v609 = vadd.f32 0.0, %v608
    %v610 = vpop.f32.mrb[0].mxu0
    %v611 = vadd.f32 0.0, %v610
    %v612 = vpop.f32.mrb[0].mxu0
    %v613 = vadd.f32 0.0, %v612
    %v614 = vpop.f32.mrb[0].mxu0
    %v615 = vadd.f32 0.0, %v614
    %616 = vmatprep.mubr.bf16.mxu0 0
    %617 = vmatmul.mubr.bf16.gmra.mrb[0].mxu0 %v201
    %v618 = vpop.f32.mrb[0].mxu0
    %v619 = vadd.f32 0.0, %v618
    %v620 = vpop.f32.mrb[0].mxu0
    %v621 = vadd.f32 0.0, %v620
    %v622 = vpop.f32.mrb[0].mxu0
    %v623 = vadd.f32 0.0, %v622
    %v624 = vpop.f32.mrb[0].mxu0
    %v625 = vadd.f32 0.0, %v624
    %626 = vmatprep.mubr.bf16.mxu0 0
    %627 = vmatmul.mubr.bf16.gmra.mrb[0].mxu0 %v204
    %v628 = vpop.f32.mrb[0].mxu0
    %v629 = vadd.f32 0.0, %v628
    %v630 = vpop.f32.mrb[0].mxu0
    %v631 = vadd.f32 0.0, %v630
    %v632 = vpop.f32.mrb[0].mxu0
    %v633 = vadd.f32 0.0, %v632
    %v634 = vpop.f32.mrb[0].mxu0
    %v635 = vadd.f32 0.0, %v634
    %636 = vmatprep.mubr.bf16.mxu0 0
    %637 = vmatmul.mubr.bf16.gmra.mrb[0].mxu0 %v207
    %v638 = vpop.f32.mrb[0].mxu0
    %v639 = vadd.f32 0.0, %v638
    %v640 = vpop.f32.mrb[0].mxu0
    %v641 = vadd.f32 0.0, %v640
    %v642 = vpop.f32.mrb[0].mxu0
    %v643 = vadd.f32 0.0, %v642
    %v644 = vpop.f32.mrb[0].mxu0
    %v645 = vadd.f32 0.0, %v644
    %646 = vmatprep.mubr.bf16.mxu0 0
    %647 = vmatmul.mubr.bf16.gmra.mrb[0].mxu0 %v210
    %v648 = vpop.f32.mrb[0].mxu0
    %v649 = vadd.f32 0.0, %v648
    %v650 = vpop.f32.mrb[0].mxu0
    %v651 = vadd.f32 0.0, %v650
    %v652 = vpop.f32.mrb[0].mxu0
    %v653 = vadd.f32 0.0, %v652
    %v654 = vpop.f32.mrb[0].mxu0
    %v655 = vadd.f32 0.0, %v654
    %656 = vmatprep.mubr.bf16.mxu0 0
    %657 = vmatmul.mubr.bf16.gmra.mrb[0].mxu0 %v213
    %v658 = vpop.f32.mrb[0].mxu0
    %v659 = vadd.f32 0.0, %v658
    %v660 = vpop.f32.mrb[0].mxu0
    %v661 = vadd.f32 0.0, %v660
    %v662 = vpop.f32.mrb[0].mxu0
    %v663 = vadd.f32 0.0, %v662
    %v664 = vpop.f32.mrb[0].mxu0
    %v665 = vadd.f32 0.0, %v664
    %666 = vdwg.mxu0
    %v667 = vld [vmem:[%s1] sm:$0x3]
    %v668 = vld [vmem:[%s3] sm:$0xff]
    %v670 = vlaneseq
    %v671 = vshrl.u32 %v670, 7
    %v672 = vsub.s32 0, %v671
    %v673 = vrot.slane %v668, %v672
    %v674 = vlaneseq
    %v675 = vshrl.u32 %v674, 7
    %v676 = vsub.s32 1, %v675
    %v677 = vrot.slane %v668, %v676
    %v678 = vlaneseq
    %v679 = vshrl.u32 %v678, 7
    %v680 = vsub.s32 2, %v679
    %v681 = vrot.slane %v668, %v680
    %v682 = vlaneseq
    %v683 = vshrl.u32 %v682, 7
    %v684 = vsub.s32 3, %v683
    %v685 = vrot.slane %v668, %v684
    %v686 = vlaneseq
    %v687 = vshrl.u32 %v686, 7
    %v688 = vsub.s32 4, %v687
    %v689 = vrot.slane %v668, %v688
    %v690 = vlaneseq
    %v691 = vshrl.u32 %v690, 7
    %v692 = vsub.s32 5, %v691
    %v693 = vrot.slane %v668, %v692
    %v694 = vlaneseq
    %v695 = vshrl.u32 %v694, 7
    %v696 = vsub.s32 6, %v695
    %v697 = vrot.slane %v668, %v696
    %v698 = vlaneseq
    %v699 = vshrl.u32 %v698, 7
    %v700 = vsub.s32 7, %v699
    %v701 = vrot.slane %v668, %v700
    %710 = vmatprep.subr.mxu0 %v252
    %711 = vmatpush1.msra.mxu0 %v250
    %712 = vmatprep.subr.mxu0 %v256
    %713 = vmatpush1.msra.mxu0 %v254
    %714 = vmatprep.subr.mxu0 %v262
    %715 = vmatpush1.msra.mxu0 %v260
    %716 = vmatprep.subr.mxu0 %v266
    %717 = vmatpush1.msra.mxu0 %v264
    %718 = vmatprep.subr.mxu0 %v272
    %719 = vmatpush1.msra.mxu0 %v270
    %720 = vmatprep.subr.mxu0 %v276
    %721 = vmatpush1.msra.mxu0 %v274
    %722 = vmatprep.subr.mxu0 %v282
    %723 = vmatpush1.msra.mxu0 %v280
    %724 = vmatprep.subr.mxu0 %v286
    %725 = vmatpush1.msra.mxu0 %v284
    %726 = vmatprep.subr.mxu0 %v292
    %727 = vmatpush1.msra.mxu0 %v290
    %728 = vmatprep.subr.mxu0 %v296
    %729 = vmatpush1.msra.mxu0 %v294
    %730 = vmatprep.subr.mxu0 %v302
    %731 = vmatpush1.msra.mxu0 %v300
    %732 = vmatprep.subr.mxu0 %v306
    %733 = vmatpush1.msra.mxu0 %v304
    %734 = vmatprep.subr.mxu0 %v312
    %735 = vmatpush1.msra.mxu0 %v310
    %736 = vmatprep.subr.mxu0 %v316
    %737 = vmatpush1.msra.mxu0 %v314
    %738 = vmatprep.subr.mxu0 %v322
    %739 = vmatpush1.msra.mxu0 %v320
    %740 = vmatprep.subr.mxu0 %v326
    %741 = vmatpush1.msra.mxu0 %v324
    %742 = vmatprep.subr.mxu0 0.0
    %743 = vmatpush1.msra.mxu0 0.0
    %744 = vmatprep.subr.mxu0 0.0
    %745 = vmatpush1.msra.mxu0 0.0
    %746 = vmatprep.subr.mxu0 0.0
    %747 = vmatpush1.msra.mxu0 0.0
    %748 = vmatprep.subr.mxu0 0.0
    %749 = vmatpush1.msra.mxu0 0.0
    %750 = vmatprep.subr.mxu0 0.0
    %751 = vmatpush1.msra.mxu0 0.0
    %752 = vmatprep.subr.mxu0 0.0
    %753 = vmatpush1.msra.mxu0 0.0
    %754 = vmatprep.subr.mxu0 0.0
    %755 = vmatpush1.msra.mxu0 0.0
    %756 = vmatprep.subr.mxu0 0.0
    %757 = vmatpush1.msra.mxu0 0.0
    %758 = vmatprep.subr.mxu0 0.0
    %759 = vmatpush1.msra.mxu0 0.0
    %760 = vmatprep.subr.mxu0 0.0
    %761 = vmatpush1.msra.mxu0 0.0
    %762 = vmatprep.subr.mxu0 0.0
    %763 = vmatpush1.msra.mxu0 0.0
    %764 = vmatprep.subr.mxu0 0.0
    %765 = vmatpush1.msra.mxu0 0.0
    %766 = vmatprep.subr.mxu0 0.0
    %767 = vmatpush1.msra.mxu0 0.0
    %768 = vmatprep.subr.mxu0 0.0
    %769 = vmatpush1.msra.mxu0 0.0
    %770 = vmatprep.subr.mxu0 0.0
    %771 = vmatpush1.msra.mxu0 0.0
    %772 = vmatprep.subr.mxu0 0.0
    %773 = vmatpush1.msra.mxu0 0.0
    %774 = vmatprep.mubr.f32.mxu0 0.0
    %775 = vmatmul.mubr.f32.gmra.mrb[0].mxu0 %v667
    %v776 = vpop.f32.mrb[0].mxu0
    %v777 = vadd.f32 %v673, %v776
    %v778 = vpop.f32.mrb[0].mxu0
    %v779 = vadd.f32 %v677, %v778
    %780 = vdwg.mxu0
    %781 = vmatprep.subr.mxu0 %v365
    %782 = vmatpush1.msra.mxu0 %v363
    %783 = vmatprep.subr.mxu0 %v369
    %784 = vmatpush1.msra.mxu0 %v367
    %785 = vmatprep.subr.mxu0 %v375
    %786 = vmatpush1.msra.mxu0 %v373
    %787 = vmatprep.subr.mxu0 %v379
    %788 = vmatpush1.msra.mxu0 %v377
    %789 = vmatprep.subr.mxu0 %v385
    %790 = vmatpush1.msra.mxu0 %v383
    %791 = vmatprep.subr.mxu0 %v389
    %792 = vmatpush1.msra.mxu0 %v387
    %793 = vmatprep.subr.mxu0 %v395
    %794 = vmatpush1.msra.mxu0 %v393
    %795 = vmatprep.subr.mxu0 %v399
    %796 = vmatpush1.msra.mxu0 %v397
    %797 = vmatprep.subr.mxu0 %v405
    %798 = vmatpush1.msra.mxu0 %v403
    %799 = vmatprep.subr.mxu0 %v409
    %800 = vmatpush1.msra.mxu0 %v407
    %801 = vmatprep.subr.mxu0 %v415
    %802 = vmatpush1.msra.mxu0 %v413
    %803 = vmatprep.subr.mxu0 %v419
    %804 = vmatpush1.msra.mxu0 %v417
    %805 = vmatprep.subr.mxu0 %v425
    %806 = vmatpush1.msra.mxu0 %v423
    %807 = vmatprep.subr.mxu0 %v429
    %808 = vmatpush1.msra.mxu0 %v427
    %809 = vmatprep.subr.mxu0 %v435
    %810 = vmatpush1.msra.mxu0 %v433
    %811 = vmatprep.subr.mxu0 %v439
    %812 = vmatpush1.msra.mxu0 %v437
    %813 = vmatprep.subr.mxu0 0.0
    %814 = vmatpush1.msra.mxu0 0.0
    %815 = vmatprep.subr.mxu0 0.0
    %816 = vmatpush1.msra.mxu0 0.0
    %817 = vmatprep.subr.mxu0 0.0
    %818 = vmatpush1.msra.mxu0 0.0
    %819 = vmatprep.subr.mxu0 0.0
    %820 = vmatpush1.msra.mxu0 0.0
    %821 = vmatprep.subr.mxu0 0.0
    %822 = vmatpush1.msra.mxu0 0.0
    %823 = vmatprep.subr.mxu0 0.0
    %824 = vmatpush1.msra.mxu0 0.0
    %825 = vmatprep.subr.mxu0 0.0
    %826 = vmatpush1.msra.mxu0 0.0
    %827 = vmatprep.subr.mxu0 0.0
    %828 = vmatpush1.msra.mxu0 0.0
    %829 = vmatprep.subr.mxu0 0.0
    %830 = vmatpush1.msra.mxu0 0.0
    %831 = vmatprep.subr.mxu0 0.0
    %832 = vmatpush1.msra.mxu0 0.0
    %833 = vmatprep.subr.mxu0 0.0
    %834 = vmatpush1.msra.mxu0 0.0
    %835 = vmatprep.subr.mxu0 0.0
    %836 = vmatpush1.msra.mxu0 0.0
    %837 = vmatprep.subr.mxu0 0.0
    %838 = vmatpush1.msra.mxu0 0.0
    %839 = vmatprep.subr.mxu0 0.0
    %840 = vmatpush1.msra.mxu0 0.0
    %841 = vmatprep.subr.mxu0 0.0
    %842 = vmatpush1.msra.mxu0 0.0
    %843 = vmatprep.subr.mxu0 0.0
    %844 = vmatpush1.msra.mxu0 0.0
    %845 = vmatprep.mubr.f32.mxu0 0.0
    %846 = vmatmul.mubr.f32.gmra.mrb[0].mxu0 %v667
    %v847 = vpop.f32.mrb[0].mxu0
    %v848 = vadd.f32 %v681, %v847
    %v849 = vpop.f32.mrb[0].mxu0
    %v850 = vadd.f32 %v685, %v849
    %851 = vdwg.mxu0
    %852 = vmatprep.subr.mxu0 %v478
    %853 = vmatpush1.msra.mxu0 %v476
    %854 = vmatprep.subr.mxu0 %v482
    %855 = vmatpush1.msra.mxu0 %v480
    %856 = vmatprep.subr.mxu0 %v488
    %857 = vmatpush1.msra.mxu0 %v486
    %858 = vmatprep.subr.mxu0 %v492
    %859 = vmatpush1.msra.mxu0 %v490
    %860 = vmatprep.subr.mxu0 %v498
    %861 = vmatpush1.msra.mxu0 %v496
    %862 = vmatprep.subr.mxu0 %v502
    %863 = vmatpush1.msra.mxu0 %v500
    %864 = vmatprep.subr.mxu0 %v508
    %865 = vmatpush1.msra.mxu0 %v506
    %866 = vmatprep.subr.mxu0 %v512
    %867 = vmatpush1.msra.mxu0 %v510
    %868 = vmatprep.subr.mxu0 %v518
    %869 = vmatpush1.msra.mxu0 %v516
    %870 = vmatprep.subr.mxu0 %v522
    %871 = vmatpush1.msra.mxu0 %v520
    %872 = vmatprep.subr.mxu0 %v528
    %873 = vmatpush1.msra.mxu0 %v526
    %874 = vmatprep.subr.mxu0 %v532
    %875 = vmatpush1.msra.mxu0 %v530
    %876 = vmatprep.subr.mxu0 %v538
    %877 = vmatpush1.msra.mxu0 %v536
    %878 = vmatprep.subr.mxu0 %v542
    %879 = vmatpush1.msra.mxu0 %v540
    %880 = vmatprep.subr.mxu0 %v548
    %881 = vmatpush1.msra.mxu0 %v546
    %882 = vmatprep.subr.mxu0 %v552
    %883 = vmatpush1.msra.mxu0 %v550
    %884 = vmatprep.subr.mxu0 0.0
    %885 = vmatpush1.msra.mxu0 0.0
    %886 = vmatprep.subr.mxu0 0.0
    %887 = vmatpush1.msra.mxu0 0.0
    %888 = vmatprep.subr.mxu0 0.0
    %889 = vmatpush1.msra.mxu0 0.0
    %890 = vmatprep.subr.mxu0 0.0
    %891 = vmatpush1.msra.mxu0 0.0
    %892 = vmatprep.subr.mxu0 0.0
    %893 = vmatpush1.msra.mxu0 0.0
    %894 = vmatprep.subr.mxu0 0.0
    %895 = vmatpush1.msra.mxu0 0.0
    %896 = vmatprep.subr.mxu0 0.0
    %897 = vmatpush1.msra.mxu0 0.0
    %898 = vmatprep.subr.mxu0 0.0
    %899 = vmatpush1.msra.mxu0 0.0
    %900 = vmatprep.subr.mxu0 0.0
    %901 = vmatpush1.msra.mxu0 0.0
    %902 = vmatprep.subr.mxu0 0.0
    %903 = vmatpush1.msra.mxu0 0.0
    %904 = vmatprep.subr.mxu0 0.0
    %905 = vmatpush1.msra.mxu0 0.0
    %906 = vmatprep.subr.mxu0 0.0
    %907 = vmatpush1.msra.mxu0 0.0
    %908 = vmatprep.subr.mxu0 0.0
    %909 = vmatpush1.msra.mxu0 0.0
    %910 = vmatprep.subr.mxu0 0.0
    %911 = vmatpush1.msra.mxu0 0.0
    %912 = vmatprep.subr.mxu0 0.0
    %913 = vmatpush1.msra.mxu0 0.0
    %914 = vmatprep.subr.mxu0 0.0
    %915 = vmatpush1.msra.mxu0 0.0
    %916 = vmatprep.mubr.f32.mxu0 0.0
    %917 = vmatmul.mubr.f32.gmra.mrb[0].mxu0 %v667
    %v918 = vpop.f32.mrb[0].mxu0
    %v919 = vadd.f32 %v689, %v918
    %v920 = vpop.f32.mrb[0].mxu0
    %v921 = vadd.f32 %v693, %v920
    %922 = vdwg.mxu0
    %923 = vmatprep.subr.mxu0 %v591
    %924 = vmatpush1.msra.mxu0 %v589
    %925 = vmatprep.subr.mxu0 %v595
    %926 = vmatpush1.msra.mxu0 %v593
    %927 = vmatprep.subr.mxu0 %v601
    %928 = vmatpush1.msra.mxu0 %v599
    %929 = vmatprep.subr.mxu0 %v605
    %930 = vmatpush1.msra.mxu0 %v603
    %931 = vmatprep.subr.mxu0 %v611
    %932 = vmatpush1.msra.mxu0 %v609
    %933 = vmatprep.subr.mxu0 %v615
    %934 = vmatpush1.msra.mxu0 %v613
    %935 = vmatprep.subr.mxu0 %v621
    %936 = vmatpush1.msra.mxu0 %v619
    %937 = vmatprep.subr.mxu0 %v625
    %938 = vmatpush1.msra.mxu0 %v623
    %939 = vmatprep.subr.mxu0 %v631
    %940 = vmatpush1.msra.mxu0 %v629
    %941 = vmatprep.subr.mxu0 %v635
    %942 = vmatpush1.msra.mxu0 %v633
    %943 = vmatprep.subr.mxu0 %v641
    %944 = vmatpush1.msra.mxu0 %v639
    %945 = vmatprep.subr.mxu0 %v645
    %946 = vmatpush1.msra.mxu0 %v643
    %947 = vmatprep.subr.mxu0 %v651
    %948 = vmatpush1.msra.mxu0 %v649
    %949 = vmatprep.subr.mxu0 %v655
    %950 = vmatpush1.msra.mxu0 %v653
    %951 = vmatprep.subr.mxu0 %v661
    %952 = vmatpush1.msra.mxu0 %v659
    %953 = vmatprep.subr.mxu0 %v665
    %954 = vmatpush1.msra.mxu0 %v663
    %955 = vmatprep.subr.mxu0 0.0
    %956 = vmatpush1.msra.mxu0 0.0
    %957 = vmatprep.subr.mxu0 0.0
    %958 = vmatpush1.msra.mxu0 0.0
    %959 = vmatprep.subr.mxu0 0.0
    %960 = vmatpush1.msra.mxu0 0.0
    %961 = vmatprep.subr.mxu0 0.0
    %962 = vmatpush1.msra.mxu0 0.0
    %963 = vmatprep.subr.mxu0 0.0
    %964 = vmatpush1.msra.mxu0 0.0
    %965 = vmatprep.subr.mxu0 0.0
    %966 = vmatpush1.msra.mxu0 0.0
    %967 = vmatprep.subr.mxu0 0.0
    %968 = vmatpush1.msra.mxu0 0.0
    %969 = vmatprep.subr.mxu0 0.0
    %970 = vmatpush1.msra.mxu0 0.0
    %971 = vmatprep.subr.mxu0 0.0
    %972 = vmatpush1.msra.mxu0 0.0
    %973 = vmatprep.subr.mxu0 0.0
    %974 = vmatpush1.msra.mxu0 0.0
    %975 = vmatprep.subr.mxu0 0.0
    %976 = vmatpush1.msra.mxu0 0.0
    %977 = vmatprep.subr.mxu0 0.0
    %978 = vmatpush1.msra.mxu0 0.0
    %979 = vmatprep.subr.mxu0 0.0
    %980 = vmatpush1.msra.mxu0 0.0
    %981 = vmatprep.subr.mxu0 0.0
    %982 = vmatpush1.msra.mxu0 0.0
    %983 = vmatprep.subr.mxu0 0.0
    %984 = vmatpush1.msra.mxu0 0.0
    %985 = vmatprep.subr.mxu0 0.0
    %986 = vmatpush1.msra.mxu0 0.0
    %987 = vmatprep.mubr.f32.mxu0 0.0
    %988 = vmatmul.mubr.f32.gmra.mrb[0].mxu0 %v667
    %v989 = vpop.f32.mrb[0].mxu0
    %v990 = vadd.f32 %v697, %v989
    %v991 = vpop.f32.mrb[0].mxu0
    %v992 = vadd.f32 %v701, %v991
    %993 = vdwg.mxu0
    %vm994 = vcmp.gt.f32.partialorder %v777, 0.0
    %vm995 = vcmp.gt.f32.partialorder %v779, 0.0
    %vm996 = vcmp.gt.f32.partialorder %v848, 0.0
    %vm997 = vcmp.gt.f32.partialorder %v850, 0.0
    %vm998 = vcmp.gt.f32.partialorder %v919, 0.0
    %vm999 = vcmp.gt.f32.partialorder %v921, 0.0
    %vm1000 = vcmp.gt.f32.partialorder %v990, 0.0
    %vm1001 = vcmp.gt.f32.partialorder %v992, 0.0
    %v1002 = vmul.f32 %v777, 0.01
    %v1003 = vmul.f32 %v779, 0.01
    %v1004 = vmul.f32 %v848, 0.01
    %v1005 = vmul.f32 %v850, 0.01
    %v1006 = vmul.f32 %v919, 0.01
    %v1007 = vmul.f32 %v921, 0.01
    %v1008 = vmul.f32 %v990, 0.01
    %v1009 = vmul.f32 %v992, 0.01
    %v1010 = vsel %vm994, %v777, %v1002
    %v1011 = vsel %vm995, %v779, %v1003
    %v1012 = vsel %vm996, %v848, %v1004
    %v1013 = vsel %vm997, %v850, %v1005
    %v1014 = vsel %vm998, %v919, %v1006
    %v1015 = vsel %vm999, %v921, %v1007
    %v1016 = vsel %vm1000, %v990, %v1008
    %v1017 = vsel %vm1001, %v992, %v1009
    %v1018 = vpack.c.bf16 %v1010, %v1010
    %v1019 = vpack.c.bf16 %v1011, %v1011
    %v1020 = vpack.c.bf16 %v1012, %v1012
    %v1021 = vpack.c.bf16 %v1013, %v1013
    %v1022 = vpack.c.bf16 %v1014, %v1014
    %v1023 = vpack.c.bf16 %v1015, %v1015
    %v1024 = vpack.c.bf16 %v1016, %v1016
    %v1025 = vpack.c.bf16 %v1017, %v1017
    %v1026 = vld [vmem:[#allocation2] sm:$0xf]
    %v1027 = vld [vmem:[#allocation2 + $0x4] sm:$0xf]
    %v1028 = vld [vmem:[#allocation2 + $0x8] sm:$0xf]
    %v1029 = vld [vmem:[#allocation2 + $0xc] sm:$0xf]
    %v1030 = vld [vmem:[#allocation2 + $0x10] sm:$0xf]
    %v1031 = vld [vmem:[#allocation2 + $0x14] sm:$0xf]
    %v1032 = vld [vmem:[#allocation2 + $0x18] sm:$0xf]
    %v1033 = vld [vmem:[#allocation2 + $0x1c] sm:$0xf]
    %v1034 = vld [vmem:[#allocation2 + $0x20] sm:$0xf]
    %v1035 = vld [vmem:[#allocation2 + $0x24] sm:$0xf]
    %v1036 = vld [vmem:[#allocation2 + $0x28] sm:$0xf]
    %v1037 = vld [vmem:[#allocation2 + $0x2c] sm:$0xf]
    %v1038 = vld [vmem:[#allocation2 + $0x30] sm:$0xf]
    %v1039 = vld [vmem:[#allocation2 + $0x34] sm:$0xf]
    %v1040 = vld [vmem:[#allocation2 + $0x38] sm:$0xf]
    %v1041 = vld [vmem:[#allocation2 + $0x3c] sm:$0xf]
    %v1042 = vld [vmem:[#allocation2 + $0x40] sm:$0xf]
    %v1043 = vld [vmem:[#allocation2 + $0x44] sm:$0xf]
    %v1044 = vld [vmem:[#allocation2 + $0x48] sm:$0xf]
    %v1045 = vld [vmem:[#allocation2 + $0x4c] sm:$0xf]
    %v1046 = vld [vmem:[#allocation2 + $0x50] sm:$0xf]
    %v1047 = vld [vmem:[#allocation2 + $0x54] sm:$0xf]
    %v1048 = vld [vmem:[#allocation2 + $0x58] sm:$0xf]
    %v1049 = vld [vmem:[#allocation2 + $0x5c] sm:$0xf]
    %v1050 = vld [vmem:[#allocation2 + $0x60] sm:$0xf]
    %v1051 = vld [vmem:[#allocation2 + $0x64] sm:$0xf]
    %v1052 = vld [vmem:[#allocation2 + $0x68] sm:$0xf]
    %v1053 = vld [vmem:[#allocation2 + $0x6c] sm:$0xf]
    %v1054 = vld [vmem:[#allocation2 + $0x70] sm:$0xf]
    %v1055 = vld [vmem:[#allocation2 + $0x74] sm:$0xf]
    %v1056 = vld [vmem:[#allocation2 + $0x78] sm:$0xf]
    %v1057 = vld [vmem:[#allocation2 + $0x7c] sm:$0xf]
    %v1058 = vld [vmem:[#allocation2 + $0x80] sm:$0xf]
    %v1059 = vld [vmem:[#allocation2 + $0x84] sm:$0xf]
    %v1060 = vld [vmem:[#allocation2 + $0x88] sm:$0xf]
    %v1061 = vld [vmem:[#allocation2 + $0x8c] sm:$0xf]
    %v1062 = vld [vmem:[#allocation2 + $0x90] sm:$0xf]
    %v1063 = vld [vmem:[#allocation2 + $0x94] sm:$0xf]
    %v1064 = vld [vmem:[#allocation2 + $0x98] sm:$0xf]
    %v1065 = vld [vmem:[#allocation2 + $0x9c] sm:$0xf]
    %v1066 = vld [vmem:[#allocation2 + $0xa0] sm:$0xf]
    %v1067 = vld [vmem:[#allocation2 + $0xa4] sm:$0xf]
    %v1068 = vld [vmem:[#allocation2 + $0xa8] sm:$0xf]
    %v1069 = vld [vmem:[#allocation2 + $0xac] sm:$0xf]
    %v1070 = vld [vmem:[#allocation2 + $0xb0] sm:$0xf]
    %v1071 = vld [vmem:[#allocation2 + $0xb4] sm:$0xf]
    %v1072 = vld [vmem:[#allocation2 + $0xb8] sm:$0xf]
    %v1073 = vld [vmem:[#allocation2 + $0xbc] sm:$0xf]
    %v1074 = vld [vmem:[#allocation2 + $0xc0] sm:$0xf]
    %v1075 = vld [vmem:[#allocation2 + $0xc4] sm:$0xf]
    %v1076 = vld [vmem:[#allocation2 + $0xc8] sm:$0xf]
    %v1077 = vld [vmem:[#allocation2 + $0xcc] sm:$0xf]
    %v1078 = vld [vmem:[#allocation2 + $0xd0] sm:$0xf]
    %v1079 = vld [vmem:[#allocation2 + $0xd4] sm:$0xf]
    %v1080 = vld [vmem:[#allocation2 + $0xd8] sm:$0xf]
    %v1081 = vld [vmem:[#allocation2 + $0xdc] sm:$0xf]
    %v1082 = vld [vmem:[#allocation2 + $0xe0] sm:$0xf]
    %v1083 = vld [vmem:[#allocation2 + $0xe4] sm:$0xf]
    %v1084 = vld [vmem:[#allocation2 + $0xe8] sm:$0xf]
    %v1085 = vld [vmem:[#allocation2 + $0xec] sm:$0xf]
    %v1086 = vld [vmem:[#allocation2 + $0xf0] sm:$0xf]
    %v1087 = vld [vmem:[#allocation2 + $0xf4] sm:$0xf]
    %v1088 = vld [vmem:[#allocation2 + $0xf8] sm:$0xf]
    %v1089 = vld [vmem:[#allocation2 + $0xfc] sm:$0xf]
    %v1090 = vld [vmem:[#allocation2 + $0x100] sm:$0xf]
    %v1091 = vld [vmem:[#allocation2 + $0x104] sm:$0xf]
    %v1092 = vld [vmem:[#allocation2 + $0x108] sm:$0xf]
    %v1093 = vld [vmem:[#allocation2 + $0x10c] sm:$0xf]
    %v1094 = vld [vmem:[#allocation2 + $0x110] sm:$0xf]
    %v1095 = vld [vmem:[#allocation2 + $0x114] sm:$0xf]
    %v1096 = vld [vmem:[#allocation2 + $0x118] sm:$0xf]
    %v1097 = vld [vmem:[#allocation2 + $0x11c] sm:$0xf]
    %v1098 = vld [vmem:[#allocation2 + $0x120] sm:$0xf]
    %v1099 = vld [vmem:[#allocation2 + $0x124] sm:$0xf]
    %v1100 = vld [vmem:[#allocation2 + $0x128] sm:$0xf]
    %v1101 = vld [vmem:[#allocation2 + $0x12c] sm:$0xf]
    %v1102 = vld [vmem:[#allocation2 + $0x130] sm:$0xf]
    %v1103 = vld [vmem:[#allocation2 + $0x134] sm:$0xf]
    %v1104 = vld [vmem:[#allocation2 + $0x138] sm:$0xf]
    %v1105 = vld [vmem:[#allocation2 + $0x13c] sm:$0xf]
    %v1106 = vld [vmem:[#allocation2 + $0x140] sm:$0xf]
    %v1107 = vld [vmem:[#allocation2 + $0x144] sm:$0xf]
    %v1108 = vld [vmem:[#allocation2 + $0x148] sm:$0xf]
    %v1109 = vld [vmem:[#allocation2 + $0x14c] sm:$0xf]
    %v1110 = vld [vmem:[#allocation2 + $0x150] sm:$0xf]
    %v1111 = vld [vmem:[#allocation2 + $0x154] sm:$0xf]
    %v1112 = vld [vmem:[#allocation2 + $0x158] sm:$0xf]
    %v1113 = vld [vmem:[#allocation2 + $0x15c] sm:$0xf]
    %v1114 = vld [vmem:[#allocation2 + $0x160] sm:$0xf]
    %v1115 = vld [vmem:[#allocation2 + $0x164] sm:$0xf]
    %v1116 = vld [vmem:[#allocation2 + $0x168] sm:$0xf]
    %v1117 = vld [vmem:[#allocation2 + $0x16c] sm:$0xf]
    %v1118 = vld [vmem:[#allocation2 + $0x170] sm:$0xf]
    %v1119 = vld [vmem:[#allocation2 + $0x174] sm:$0xf]
    %v1120 = vld [vmem:[#allocation2 + $0x178] sm:$0xf]
    %v1121 = vld [vmem:[#allocation2 + $0x17c] sm:$0xf]
    %v1122 = vld [vmem:[#allocation2 + $0x180] sm:$0xf]
    %v1123 = vld [vmem:[#allocation2 + $0x184] sm:$0xf]
    %v1124 = vld [vmem:[#allocation2 + $0x188] sm:$0xf]
    %v1125 = vld [vmem:[#allocation2 + $0x18c] sm:$0xf]
    %v1126 = vld [vmem:[#allocation2 + $0x190] sm:$0xf]
    %v1127 = vld [vmem:[#allocation2 + $0x194] sm:$0xf]
    %v1128 = vld [vmem:[#allocation2 + $0x198] sm:$0xf]
    %v1129 = vld [vmem:[#allocation2 + $0x19c] sm:$0xf]
    %v1130 = vld [vmem:[#allocation2 + $0x1a0] sm:$0xf]
    %v1131 = vld [vmem:[#allocation2 + $0x1a4] sm:$0xf]
    %v1132 = vld [vmem:[#allocation2 + $0x1a8] sm:$0xf]
    %v1133 = vld [vmem:[#allocation2 + $0x1ac] sm:$0xf]
    %v1134 = vld [vmem:[#allocation2 + $0x1b0] sm:$0xf]
    %v1135 = vld [vmem:[#allocation2 + $0x1b4] sm:$0xf]
    %v1136 = vld [vmem:[#allocation2 + $0x1b8] sm:$0xf]
    %v1137 = vld [vmem:[#allocation2 + $0x1bc] sm:$0xf]
    %v1138 = vld [vmem:[#allocation2 + $0x1c0] sm:$0xf]
    %v1139 = vld [vmem:[#allocation2 + $0x1c4] sm:$0xf]
    %v1140 = vld [vmem:[#allocation2 + $0x1c8] sm:$0xf]
    %v1141 = vld [vmem:[#allocation2 + $0x1cc] sm:$0xf]
    %v1142 = vld [vmem:[#allocation2 + $0x1d0] sm:$0xf]
    %v1143 = vld [vmem:[#allocation2 + $0x1d4] sm:$0xf]
    %v1144 = vld [vmem:[#allocation2 + $0x1d8] sm:$0xf]
    %v1145 = vld [vmem:[#allocation2 + $0x1dc] sm:$0xf]
    %v1146 = vld [vmem:[#allocation2 + $0x1e0] sm:$0xf]
    %v1147 = vld [vmem:[#allocation2 + $0x1e4] sm:$0xf]
    %v1148 = vld [vmem:[#allocation2 + $0x1e8] sm:$0xf]
    %v1149 = vld [vmem:[#allocation2 + $0x1ec] sm:$0xf]
    %v1150 = vld [vmem:[#allocation2 + $0x1f0] sm:$0xf]
    %v1151 = vld [vmem:[#allocation2 + $0x1f4] sm:$0xf]
    %v1152 = vld [vmem:[#allocation2 + $0x1f8] sm:$0xf]
    %v1153 = vld [vmem:[#allocation2 + $0x1fc] sm:$0xf]
    %v1154 = vld [vmem:[%s5] sm:$0x1]
    %v1156 = vlaneseq
    %v1157 = vshrl.u32 %v1156, 7
    %v1158 = vsub.s32 0, %v1157
    %v1159 = vrot.slane %v1154, %v1158
    %v1289 = vunpack.c.l.b16 %v1026
    %v1290 = vunpack.c.l.b16 %v1027
    %v1291 = vunpack.c.l.b16 %v1028
    %v1292 = vunpack.c.l.b16 %v1029
    %v1293 = vunpack.c.l.b16 %v1030
    %v1294 = vunpack.c.l.b16 %v1031
    %v1295 = vunpack.c.l.b16 %v1032
    %v1296 = vunpack.c.l.b16 %v1033
    %v1297 = vunpack.c.l.b16 %v1034
    %v1298 = vunpack.c.l.b16 %v1035
    %v1299 = vunpack.c.l.b16 %v1036
    %v1300 = vunpack.c.l.b16 %v1037
    %v1301 = vunpack.c.l.b16 %v1038
    %v1302 = vunpack.c.l.b16 %v1039
    %v1303 = vunpack.c.l.b16 %v1040
    %v1304 = vunpack.c.l.b16 %v1041
    %v1305 = vunpack.c.l.b16 %v1042
    %v1306 = vunpack.c.l.b16 %v1043
    %v1307 = vunpack.c.l.b16 %v1044
    %v1308 = vunpack.c.l.b16 %v1045
    %v1309 = vunpack.c.l.b16 %v1046
    %v1310 = vunpack.c.l.b16 %v1047
    %v1311 = vunpack.c.l.b16 %v1048
    %v1312 = vunpack.c.l.b16 %v1049
    %v1313 = vunpack.c.l.b16 %v1050
    %v1314 = vunpack.c.l.b16 %v1051
    %v1315 = vunpack.c.l.b16 %v1052
    %v1316 = vunpack.c.l.b16 %v1053
    %v1317 = vunpack.c.l.b16 %v1054
    %v1318 = vunpack.c.l.b16 %v1055
    %v1319 = vunpack.c.l.b16 %v1056
    %v1320 = vunpack.c.l.b16 %v1057
    %v1321 = vunpack.c.l.b16 %v1058
    %v1322 = vunpack.c.l.b16 %v1059
    %v1323 = vunpack.c.l.b16 %v1060
    %v1324 = vunpack.c.l.b16 %v1061
    %v1325 = vunpack.c.l.b16 %v1062
    %v1326 = vunpack.c.l.b16 %v1063
    %v1327 = vunpack.c.l.b16 %v1064
    %v1328 = vunpack.c.l.b16 %v1065
    %v1329 = vunpack.c.l.b16 %v1066
    %v1330 = vunpack.c.l.b16 %v1067
    %v1331 = vunpack.c.l.b16 %v1068
    %v1332 = vunpack.c.l.b16 %v1069
    %v1333 = vunpack.c.l.b16 %v1070
    %v1334 = vunpack.c.l.b16 %v1071
    %v1335 = vunpack.c.l.b16 %v1072
    %v1336 = vunpack.c.l.b16 %v1073
    %v1337 = vunpack.c.l.b16 %v1074
    %v1338 = vunpack.c.l.b16 %v1075
    %v1339 = vunpack.c.l.b16 %v1076
    %v1340 = vunpack.c.l.b16 %v1077
    %v1341 = vunpack.c.l.b16 %v1078
    %v1342 = vunpack.c.l.b16 %v1079
    %v1343 = vunpack.c.l.b16 %v1080
    %v1344 = vunpack.c.l.b16 %v1081
    %v1345 = vunpack.c.l.b16 %v1082
    %v1346 = vunpack.c.l.b16 %v1083
    %v1347 = vunpack.c.l.b16 %v1084
    %v1348 = vunpack.c.l.b16 %v1085
    %v1349 = vunpack.c.l.b16 %v1086
    %v1350 = vunpack.c.l.b16 %v1087
    %v1351 = vunpack.c.l.b16 %v1088
    %v1352 = vunpack.c.l.b16 %v1089
    %v1353 = vunpack.c.l.b16 %v1090
    %v1354 = vunpack.c.l.b16 %v1091
    %v1355 = vunpack.c.l.b16 %v1092
    %v1356 = vunpack.c.l.b16 %v1093
    %v1357 = vunpack.c.l.b16 %v1094
    %v1358 = vunpack.c.l.b16 %v1095
    %v1359 = vunpack.c.l.b16 %v1096
    %v1360 = vunpack.c.l.b16 %v1097
    %v1361 = vunpack.c.l.b16 %v1098
    %v1362 = vunpack.c.l.b16 %v1099
    %v1363 = vunpack.c.l.b16 %v1100
    %v1364 = vunpack.c.l.b16 %v1101
    %v1365 = vunpack.c.l.b16 %v1102
    %v1366 = vunpack.c.l.b16 %v1103
    %v1367 = vunpack.c.l.b16 %v1104
    %v1368 = vunpack.c.l.b16 %v1105
    %v1369 = vunpack.c.l.b16 %v1106
    %v1370 = vunpack.c.l.b16 %v1107
    %v1371 = vunpack.c.l.b16 %v1108
    %v1372 = vunpack.c.l.b16 %v1109
    %v1373 = vunpack.c.l.b16 %v1110
    %v1374 = vunpack.c.l.b16 %v1111
    %v1375 = vunpack.c.l.b16 %v1112
    %v1376 = vunpack.c.l.b16 %v1113
    %v1377 = vunpack.c.l.b16 %v1114
    %v1378 = vunpack.c.l.b16 %v1115
    %v1379 = vunpack.c.l.b16 %v1116
    %v1380 = vunpack.c.l.b16 %v1117
    %v1381 = vunpack.c.l.b16 %v1118
    %v1382 = vunpack.c.l.b16 %v1119
    %v1383 = vunpack.c.l.b16 %v1120
    %v1384 = vunpack.c.l.b16 %v1121
    %v1385 = vunpack.c.l.b16 %v1122
    %v1386 = vunpack.c.l.b16 %v1123
    %v1387 = vunpack.c.l.b16 %v1124
    %v1388 = vunpack.c.l.b16 %v1125
    %v1389 = vunpack.c.l.b16 %v1126
    %v1390 = vunpack.c.l.b16 %v1127
    %v1391 = vunpack.c.l.b16 %v1128
    %v1392 = vunpack.c.l.b16 %v1129
    %v1393 = vunpack.c.l.b16 %v1130
    %v1394 = vunpack.c.l.b16 %v1131
    %v1395 = vunpack.c.l.b16 %v1132
    %v1396 = vunpack.c.l.b16 %v1133
    %v1397 = vunpack.c.l.b16 %v1134
    %v1398 = vunpack.c.l.b16 %v1135
    %v1399 = vunpack.c.l.b16 %v1136
    %v1400 = vunpack.c.l.b16 %v1137
    %v1401 = vunpack.c.l.b16 %v1138
    %v1402 = vunpack.c.l.b16 %v1139
    %v1403 = vunpack.c.l.b16 %v1140
    %v1404 = vunpack.c.l.b16 %v1141
    %v1405 = vunpack.c.l.b16 %v1142
    %v1406 = vunpack.c.l.b16 %v1143
    %v1407 = vunpack.c.l.b16 %v1144
    %v1408 = vunpack.c.l.b16 %v1145
    %v1409 = vunpack.c.l.b16 %v1146
    %v1410 = vunpack.c.l.b16 %v1147
    %v1411 = vunpack.c.l.b16 %v1148
    %v1412 = vunpack.c.l.b16 %v1149
    %v1413 = vunpack.c.l.b16 %v1150
    %v1414 = vunpack.c.l.b16 %v1151
    %v1415 = vunpack.c.l.b16 %v1152
    %v1416 = vunpack.c.l.b16 %v1153
    %v1417 = vpack.c.b16 %v1290, %v1289
    %v1418 = vpack.c.b16 %v1292, %v1291
    %v1419 = vpack.c.b16 %v1294, %v1293
    %v1420 = vpack.c.b16 %v1296, %v1295
    %v1421 = vpack.c.b16 %v1298, %v1297
    %v1422 = vpack.c.b16 %v1300, %v1299
    %v1423 = vpack.c.b16 %v1302, %v1301
    %v1424 = vpack.c.b16 %v1304, %v1303
    %v1425 = vpack.c.b16 %v1306, %v1305
    %v1426 = vpack.c.b16 %v1308, %v1307
    %v1427 = vpack.c.b16 %v1310, %v1309
    %v1428 = vpack.c.b16 %v1312, %v1311
    %v1429 = vpack.c.b16 %v1314, %v1313
    %v1430 = vpack.c.b16 %v1316, %v1315
    %v1431 = vpack.c.b16 %v1318, %v1317
    %v1432 = vpack.c.b16 %v1320, %v1319
    %v1433 = vpack.c.b16 %v1322, %v1321
    %v1434 = vpack.c.b16 %v1324, %v1323
    %v1435 = vpack.c.b16 %v1326, %v1325
    %v1436 = vpack.c.b16 %v1328, %v1327
    %v1437 = vpack.c.b16 %v1330, %v1329
    %v1438 = vpack.c.b16 %v1332, %v1331
    %v1439 = vpack.c.b16 %v1334, %v1333
    %v1440 = vpack.c.b16 %v1336, %v1335
    %v1441 = vpack.c.b16 %v1338, %v1337
    %v1442 = vpack.c.b16 %v1340, %v1339
    %v1443 = vpack.c.b16 %v1342, %v1341
    %v1444 = vpack.c.b16 %v1344, %v1343
    %v1445 = vpack.c.b16 %v1346, %v1345
    %v1446 = vpack.c.b16 %v1348, %v1347
    %v1447 = vpack.c.b16 %v1350, %v1349
    %v1448 = vpack.c.b16 %v1352, %v1351
    %v1449 = vpack.c.b16 %v1354, %v1353
    %v1450 = vpack.c.b16 %v1356, %v1355
    %v1451 = vpack.c.b16 %v1358, %v1357
    %v1452 = vpack.c.b16 %v1360, %v1359
    %v1453 = vpack.c.b16 %v1362, %v1361
    %v1454 = vpack.c.b16 %v1364, %v1363
    %v1455 = vpack.c.b16 %v1366, %v1365
    %v1456 = vpack.c.b16 %v1368, %v1367
    %v1457 = vpack.c.b16 %v1370, %v1369
    %v1458 = vpack.c.b16 %v1372, %v1371
    %v1459 = vpack.c.b16 %v1374, %v1373
    %v1460 = vpack.c.b16 %v1376, %v1375
    %v1461 = vpack.c.b16 %v1378, %v1377
    %v1462 = vpack.c.b16 %v1380, %v1379
    %v1463 = vpack.c.b16 %v1382, %v1381
    %v1464 = vpack.c.b16 %v1384, %v1383
    %v1465 = vpack.c.b16 %v1386, %v1385
    %v1466 = vpack.c.b16 %v1388, %v1387
    %v1467 = vpack.c.b16 %v1390, %v1389
    %v1468 = vpack.c.b16 %v1392, %v1391
    %v1469 = vpack.c.b16 %v1394, %v1393
    %v1470 = vpack.c.b16 %v1396, %v1395
    %v1471 = vpack.c.b16 %v1398, %v1397
    %v1472 = vpack.c.b16 %v1400, %v1399
    %v1473 = vpack.c.b16 %v1402, %v1401
    %v1474 = vpack.c.b16 %v1404, %v1403
    %v1475 = vpack.c.b16 %v1406, %v1405
    %v1476 = vpack.c.b16 %v1408, %v1407
    %v1477 = vpack.c.b16 %v1410, %v1409
    %v1478 = vpack.c.b16 %v1412, %v1411
    %v1479 = vpack.c.b16 %v1414, %v1413
    %v1480 = vpack.c.b16 %v1416, %v1415
    %1545 = vmatprep.subr.bf16.mxu0 0
    %1546 = vmatpush1.bf16.msra.mxu0 %v1417
    %1547 = vmatprep.subr.bf16.mxu0 0
    %1548 = vmatpush1.bf16.msra.mxu0 %v1418
    %1549 = vmatprep.subr.bf16.mxu0 0
    %1550 = vmatpush1.bf16.msra.mxu0 %v1419
    %1551 = vmatprep.subr.bf16.mxu0 0
    %1552 = vmatpush1.bf16.msra.mxu0 %v1420
    %1553 = vmatprep.subr.bf16.mxu0 0
    %1554 = vmatpush1.bf16.msra.mxu0 %v1421
    %1555 = vmatprep.subr.bf16.mxu0 0
    %1556 = vmatpush1.bf16.msra.mxu0 %v1422
    %1557 = vmatprep.subr.bf16.mxu0 0
    %1558 = vmatpush1.bf16.msra.mxu0 %v1423
    %1559 = vmatprep.subr.bf16.mxu0 0
    %1560 = vmatpush1.bf16.msra.mxu0 %v1424
    %1561 = vmatprep.subr.bf16.mxu0 0
    %1562 = vmatpush1.bf16.msra.mxu0 %v1425
    %1563 = vmatprep.subr.bf16.mxu0 0
    %1564 = vmatpush1.bf16.msra.mxu0 %v1426
    %1565 = vmatprep.subr.bf16.mxu0 0
    %1566 = vmatpush1.bf16.msra.mxu0 %v1427
    %1567 = vmatprep.subr.bf16.mxu0 0
    %1568 = vmatpush1.bf16.msra.mxu0 %v1428
    %1569 = vmatprep.subr.bf16.mxu0 0
    %1570 = vmatpush1.bf16.msra.mxu0 %v1429
    %1571 = vmatprep.subr.bf16.mxu0 0
    %1572 = vmatpush1.bf16.msra.mxu0 %v1430
    %1573 = vmatprep.subr.bf16.mxu0 0
    %1574 = vmatpush1.bf16.msra.mxu0 %v1431
    %1575 = vmatprep.subr.bf16.mxu0 0
    %1576 = vmatpush1.bf16.msra.mxu0 %v1432
    %1577 = vmatprep.mubr.bf16.mxu0 %v1019
    %1578 = vmatmul.mubr.bf16.gmra.mrb[0].mxu0 %v1018
    %v1579 = vpop.f32.mrb[0].mxu0
    %v1580 = vadd.f32 %v1159, %v1579
    %v1581 = vpop.f32.mrb[0].mxu0
    %v1582 = vpop.f32.mrb[0].mxu0
    %v1583 = vpop.f32.mrb[0].mxu0
    %1584 = vdwg.mxu0
    %1585 = vmatprep.subr.bf16.mxu0 0
    %1586 = vmatpush1.bf16.msra.mxu0 %v1433
    %1587 = vmatprep.subr.bf16.mxu0 0
    %1588 = vmatpush1.bf16.msra.mxu0 %v1434
    %1589 = vmatprep.subr.bf16.mxu0 0
    %1590 = vmatpush1.bf16.msra.mxu0 %v1435
    %1591 = vmatprep.subr.bf16.mxu0 0
    %1592 = vmatpush1.bf16.msra.mxu0 %v1436
    %1593 = vmatprep.subr.bf16.mxu0 0
    %1594 = vmatpush1.bf16.msra.mxu0 %v1437
    %1595 = vmatprep.subr.bf16.mxu0 0
    %1596 = vmatpush1.bf16.msra.mxu0 %v1438
    %1597 = vmatprep.subr.bf16.mxu0 0
    %1598 = vmatpush1.bf16.msra.mxu0 %v1439
    %1599 = vmatprep.subr.bf16.mxu0 0
    %1600 = vmatpush1.bf16.msra.mxu0 %v1440
    %1601 = vmatprep.subr.bf16.mxu0 0
    %1602 = vmatpush1.bf16.msra.mxu0 %v1441
    %1603 = vmatprep.subr.bf16.mxu0 0
    %1604 = vmatpush1.bf16.msra.mxu0 %v1442
    %1605 = vmatprep.subr.bf16.mxu0 0
    %1606 = vmatpush1.bf16.msra.mxu0 %v1443
    %1607 = vmatprep.subr.bf16.mxu0 0
    %1608 = vmatpush1.bf16.msra.mxu0 %v1444
    %1609 = vmatprep.subr.bf16.mxu0 0
    %1610 = vmatpush1.bf16.msra.mxu0 %v1445
    %1611 = vmatprep.subr.bf16.mxu0 0
    %1612 = vmatpush1.bf16.msra.mxu0 %v1446
    %1613 = vmatprep.subr.bf16.mxu0 0
    %1614 = vmatpush1.bf16.msra.mxu0 %v1447
    %1615 = vmatprep.subr.bf16.mxu0 0
    %1616 = vmatpush1.bf16.msra.mxu0 %v1448
    %1617 = vmatprep.mubr.bf16.mxu0 %v1021
    %1618 = vmatmul.mubr.bf16.gmra.mrb[0].mxu0 %v1020
    %v1619 = vpop.f32.mrb[0].mxu0
    %v1620 = vadd.f32 %v1580, %v1619
    %v1621 = vpop.f32.mrb[0].mxu0
    %v1622 = vpop.f32.mrb[0].mxu0
    %v1623 = vpop.f32.mrb[0].mxu0
    %1624 = vdwg.mxu0
    %1625 = vmatprep.subr.bf16.mxu0 0
    %1626 = vmatpush1.bf16.msra.mxu0 %v1449
    %1627 = vmatprep.subr.bf16.mxu0 0
    %1628 = vmatpush1.bf16.msra.mxu0 %v1450
    %1629 = vmatprep.subr.bf16.mxu0 0
    %1630 = vmatpush1.bf16.msra.mxu0 %v1451
    %1631 = vmatprep.subr.bf16.mxu0 0
    %1632 = vmatpush1.bf16.msra.mxu0 %v1452
    %1633 = vmatprep.subr.bf16.mxu0 0
    %1634 = vmatpush1.bf16.msra.mxu0 %v1453
    %1635 = vmatprep.subr.bf16.mxu0 0
    %1636 = vmatpush1.bf16.msra.mxu0 %v1454
    %1637 = vmatprep.subr.bf16.mxu0 0
    %1638 = vmatpush1.bf16.msra.mxu0 %v1455
    %1639 = vmatprep.subr.bf16.mxu0 0
    %1640 = vmatpush1.bf16.msra.mxu0 %v1456
    %1641 = vmatprep.subr.bf16.mxu0 0
    %1642 = vmatpush1.bf16.msra.mxu0 %v1457
    %1643 = vmatprep.subr.bf16.mxu0 0
    %1644 = vmatpush1.bf16.msra.mxu0 %v1458
    %1645 = vmatprep.subr.bf16.mxu0 0
    %1646 = vmatpush1.bf16.msra.mxu0 %v1459
    %1647 = vmatprep.subr.bf16.mxu0 0
    %1648 = vmatpush1.bf16.msra.mxu0 %v1460
    %1649 = vmatprep.subr.bf16.mxu0 0
    %1650 = vmatpush1.bf16.msra.mxu0 %v1461
    %1651 = vmatprep.subr.bf16.mxu0 0
    %1652 = vmatpush1.bf16.msra.mxu0 %v1462
    %1653 = vmatprep.subr.bf16.mxu0 0
    %1654 = vmatpush1.bf16.msra.mxu0 %v1463
    %1655 = vmatprep.subr.bf16.mxu0 0
    %1656 = vmatpush1.bf16.msra.mxu0 %v1464
    %1657 = vmatprep.mubr.bf16.mxu0 %v1023
    %1658 = vmatmul.mubr.bf16.gmra.mrb[0].mxu0 %v1022
    %v1659 = vpop.f32.mrb[0].mxu0
    %v1660 = vadd.f32 %v1620, %v1659
    %v1661 = vpop.f32.mrb[0].mxu0
    %v1662 = vpop.f32.mrb[0].mxu0
    %v1663 = vpop.f32.mrb[0].mxu0
    %1664 = vdwg.mxu0
    %1665 = vmatprep.subr.bf16.mxu0 0
    %1666 = vmatpush1.bf16.msra.mxu0 %v1465
    %1667 = vmatprep.subr.bf16.mxu0 0
    %1668 = vmatpush1.bf16.msra.mxu0 %v1466
    %1669 = vmatprep.subr.bf16.mxu0 0
    %1670 = vmatpush1.bf16.msra.mxu0 %v1467
    %1671 = vmatprep.subr.bf16.mxu0 0
    %1672 = vmatpush1.bf16.msra.mxu0 %v1468
    %1673 = vmatprep.subr.bf16.mxu0 0
    %1674 = vmatpush1.bf16.msra.mxu0 %v1469
    %1675 = vmatprep.subr.bf16.mxu0 0
    %1676 = vmatpush1.bf16.msra.mxu0 %v1470
    %1677 = vmatprep.subr.bf16.mxu0 0
    %1678 = vmatpush1.bf16.msra.mxu0 %v1471
    %1679 = vmatprep.subr.bf16.mxu0 0
    %1680 = vmatpush1.bf16.msra.mxu0 %v1472
    %1681 = vmatprep.subr.bf16.mxu0 0
    %1682 = vmatpush1.bf16.msra.mxu0 %v1473
    %1683 = vmatprep.subr.bf16.mxu0 0
    %1684 = vmatpush1.bf16.msra.mxu0 %v1474
    %1685 = vmatprep.subr.bf16.mxu0 0
    %1686 = vmatpush1.bf16.msra.mxu0 %v1475
    %1687 = vmatprep.subr.bf16.mxu0 0
    %1688 = vmatpush1.bf16.msra.mxu0 %v1476
    %1689 = vmatprep.subr.bf16.mxu0 0
    %1690 = vmatpush1.bf16.msra.mxu0 %v1477
    %1691 = vmatprep.subr.bf16.mxu0 0
    %1692 = vmatpush1.bf16.msra.mxu0 %v1478
    %1693 = vmatprep.subr.bf16.mxu0 0
    %1694 = vmatpush1.bf16.msra.mxu0 %v1479
    %1695 = vmatprep.subr.bf16.mxu0 0
    %1696 = vmatpush1.bf16.msra.mxu0 %v1480
    %1697 = vmatprep.mubr.bf16.mxu0 %v1025
    %1698 = vmatmul.mubr.bf16.gmra.mrb[0].mxu0 %v1024
    %v1699 = vpop.f32.mrb[0].mxu0
    %v1700 = vadd.f32 %v1660, %v1699
    %v1701 = vpop.f32.mrb[0].mxu0
    %v1702 = vpop.f32.mrb[0].mxu0
    %v1703 = vpop.f32.mrb[0].mxu0
    %1704 = vdwg.mxu0
    %v1705 = vlaneseq
    %v1706 = vand.u32 %v1705, 127
    %vm1707 = vcmp.eq.s32.totalorder %v1706, 0
    %v1708 = vxor.u32 %v1700, 2147483648
    %v1709 = vmul.f32 %v1708, 1.442695
    %v1710 = vpow.pop %v1709
    %v1711 = vadd.f32 %v1710, 1.0
    %v1712 = vrcp.pop %v1711
    %v1713 = vmul.f32 1.0, %v1712
    %v1714 = vsel %vm1707, %v1713, %v1700
    %1715 = vst [vmem:[%s6] sm:$0x3] %v1714
    // Predicated region
    $region30: #{multitask_heads.1} parent=1 // pred_check
      _
    $region31: #{multitask_heads.1} parent=1 // pred_check_branch
      %1717 = sbr.rel (0) target = $region33
    $region32: #{multitask_heads.1} parent=1 // pred_region
      _
    $region33: #{multitask_heads.1} parent=1 // pred_fallthru
      _
    // Predicated region
    $region34: #{multitask_heads.1} parent=1 // pred_check
      _
    $region35: #{multitask_heads.1} parent=1 // pred_check_branch
      %1719 = sbr.rel (0) target = $region37
    $region36: #{multitask_heads.1} parent=1 // pred_region
      _
    $region37: #{multitask_heads.1} parent=1 // pred_fallthru
      _
    %1720 = vsyncpa [#allocation3], 1

</llo_original>
